<compile_context>
chip_gen: v7x
topology: tpu7x:2x2x1
jax: 0.10.0
libtpu: 0.0.40
codegen_flags: <defaults>
</compile_context>

<pallas_src>
import math
from functools import partial

import jax
import jax.numpy as jnp
from jax.experimental import pallas as pl
from jax.experimental.pallas import tpu as pltpu


# ----------------------------------------------------------------------------
# small helpers
# ----------------------------------------------------------------------------
def _round_up(x, m):
    return ((x + m - 1) // m) * m


def _gen_config():
    """Per-generation tiling / precision knobs (safe fallbacks if unknown)."""
    try:
        kind = jax.devices()[0].device_kind.lower()
    except Exception:
        kind = ""
    old = any(g in kind for g in ("v2", "v3", "v4", "v5"))
    cfg = {
        "softmax_bf16": not old,          # bf16 EUP/VPU only on v6e and newer
        "tq": 128 if old else 256,        # MXU M dim: 256 on v6e/v7x
        "vmem_limit": None,
    }
    if ("v5" in kind) or ("v6" in kind):
        cfg["vmem_limit"] = 100 * 1024 * 1024   # 128 MiB physical
    elif "7" in kind:
        cfg["vmem_limit"] = 48 * 1024 * 1024    # v7x: 64 MiB physical
    return cfg


# ----------------------------------------------------------------------------
# Pass 1: LayerNorm1 + q/k/v projections + RoPE (once per row, tiled over S)
# ----------------------------------------------------------------------------
def _qkv_rope_kernel(x_ref, cos_ref, sin_ref,
                     ln1_g_ref, ln1_b_ref,
                     wq_ref, bq_ref, wk_ref, bk_ref, wv_ref, bv_ref,
                     q_out_ref, k_out_ref, v_out_ref,
                     *, n_heads, head_size):
    f32, bf16 = jnp.float32, jnp.bfloat16
    eps = 1e-5
    hs, hs2 = head_size, head_size // 2

    x = x_ref[0].astype(f32)                                      # (TS, D)
    mu = jnp.mean(x, axis=-1, keepdims=True)
    var = jnp.mean((x - mu) ** 2, axis=-1, keepdims=True)
    xn = ((x - mu) * jax.lax.rsqrt(var + eps) * ln1_g_ref[...]
          + ln1_b_ref[...]).astype(bf16)

    # bf16 operands, f32 accumulation.  wq/bq carry 1/sqrt(head_size);
    # wq/bq/wk/bk are column-permuted to the per-head rotate-half layout.
    q = jnp.dot(xn, wq_ref[...], preferred_element_type=f32) + bq_ref[...]
    k = jnp.dot(xn, wk_ref[...], preferred_element_type=f32) + bk_ref[...]
    v = jnp.dot(xn, wv_ref[...], preferred_element_type=f32) + bv_ref[...]

    cos = cos_ref[...]                                            # (TS, D)
    sin = sin_ref[...]

    def rope_full(t):
        # full-width rotate-half: heavy mul/adds are lane-dense (D wide);
        # the per-head half swap is 2*H static slices built once per tile.
        parts = []
        for h in range(n_heads):
            parts.append(-t[:, h * hs + hs2:(h + 1) * hs])
            parts.append(t[:, h * hs:h * hs + hs2])
        rot = jnp.concatenate(parts, axis=-1)
        return t * cos + rot * sin

    q_out_ref[0] = rope_full(q).astype(bf16)
    k_out_ref[0] = rope_full(k).astype(bf16)
    v_out_ref[0] = v.astype(bf16)


# ----------------------------------------------------------------------------
# Pass 2: attention + output projection + LayerNorm2 + FFN + residuals
# ----------------------------------------------------------------------------
def _attn_ffn_kernel(x_ref, q_ref, k_ref, v_ref, mask_ref,
                     wo_ref, bo_ref, ln2_g_ref, ln2_b_ref,
                     w1_ref, b1_ref, w2_ref, b2_ref,
                     out_ref,
                     attn_acc_ref, ff_acc_ref,
                     *, n_heads, head_size, ffn_chunk, softmax_bf16):
    f32, bf16 = jnp.float32, jnp.bfloat16
    eps = 1e-5
    hs = head_size

    q = q_ref[0]                       # (TQ, D) bf16, post-RoPE, pre-scaled
    k = k_ref[0]                       # (S,  D) bf16, post-RoPE
    v = v_ref[0]                       # (S,  D) bf16

    maskf = mask_ref[0]                # (1, S) f32, 1 = attend
    bias = jnp.where(maskf > 0.0, 0.0, -1e30)
    exp_dtype = bf16 if softmax_bf16 else f32

    # ----- attention, one head at a time (n_heads is small, static unroll) ---
    for h in range(n_heads):
        sl = slice(h * hs, (h + 1) * hs)
        # scores: contract last dims of q/k head slices (no explicit k.T)
        s = jax.lax.dot_general(q[:, sl], k[:, sl], (((1,), (1,)), ((), ())),
                                preferred_element_type=f32)        # (TQ, S)
        s = s + bias
        m = jnp.max(s, axis=-1, keepdims=True)
        p = jnp.exp((s - m).astype(exp_dtype))                     # unnormalized
        denom = jnp.sum(p, axis=-1, keepdims=True, dtype=f32)      # (TQ, 1)
        pv = jnp.dot(p.astype(bf16), v[:, sl], preferred_element_type=f32)
        # normalize after PV: O(TQ*hs) multiplies instead of O(TQ*S)
        attn_acc_ref[:, sl] = (pv * pl.reciprocal(denom, approx=True)).astype(bf16)

    attn = jnp.dot(attn_acc_ref[...], wo_ref[...],
                   preferred_element_type=f32) + bo_ref[...]
    x1 = x_ref[0].astype(f32) + attn            # residual 1 (dropout = identity)

    # ----- LayerNorm 2 + chunked FeedForward (accumulate in VMEM scratch) ----
    mu = jnp.mean(x1, axis=-1, keepdims=True)
    var = jnp.mean((x1 - mu) ** 2, axis=-1, keepdims=True)
    x2 = ((x1 - mu) * jax.lax.rsqrt(var + eps) * ln2_g_ref[...]
          + ln2_b_ref[...]).astype(bf16)

    d_ff = w1_ref.shape[1]
    for idx, c0 in enumerate(range(0, d_ff, ffn_chunk)):   # static unroll
        c1 = min(c0 + ffn_chunk, d_ff)
        hck = jnp.dot(x2, w1_ref[:, c0:c1], preferred_element_type=f32)
        hck = jnp.maximum(hck + b1_ref[:, c0:c1], 0.0).astype(bf16)
        contrib = jnp.dot(hck, w2_ref[c0:c1, :], preferred_element_type=f32)
        if idx == 0:
            ff_acc_ref[...] = contrib
        else:
            ff_acc_ref[...] += contrib

    out_ref[0] = (x1 + ff_acc_ref[...] + b2_ref[...]).astype(out_ref.dtype)


# ----------------------------------------------------------------------------
# One-time host-side weight preprocessing (do NOT call per forward)
# ----------------------------------------------------------------------------
def prepare_params(params, n_heads, max_seq_len=4096):
    D = params["q_w"].shape[0]
    hs = D // n_heads
    hs2 = hs // 2
    bf16, f32 = jnp.bfloat16, jnp.float32

    # per-head column permutation: interleaved -> rotate-half (evens | odds)
    perm = jnp.concatenate([
        jnp.concatenate([h * hs + jnp.arange(0, hs, 2),
                         h * hs + jnp.arange(1, hs, 2)])
        for h in range(n_heads)])
    scale = 1.0 / math.sqrt(hs)
    tw = jnp.transpose                              # torch (out,in) -> (in,out)

    # RoPE tables at full width D, per-head rotate-half layout.
    theta = 1.0 / (10000.0 ** (jnp.arange(0, hs, 2)[:hs2].astype(f32) / hs))
    ang = jnp.arange(max_seq_len, dtype=f32)[:, None] * theta[None, :]
    cos_hs = jnp.concatenate([jnp.cos(ang)] * 2, axis=-1)           # (L, hs)
    sin_hs = jnp.concatenate([jnp.sin(ang)] * 2, axis=-1)

    return dict(
        d_model=D, n_heads=n_heads, head_size=hs, max_seq_len=max_seq_len,
        ln1_g=params["ln1_g"].reshape(1, D).astype(f32),
        ln1_b=params["ln1_b"].reshape(1, D).astype(f32),
        ln2_g=params["ln2_g"].reshape(1, D).astype(f32),
        ln2_b=params["ln2_b"].reshape(1, D).astype(f32),
        wq=(tw(params["q_w"]) * scale)[:, perm].astype(bf16),
        bq=(params["q_b"] * scale)[perm].reshape(1, D).astype(f32),
        wk=tw(params["k_w"])[:, perm].astype(bf16),
        bk=params["k_b"][perm].reshape(1, D).astype(f32),
        wv=tw(params["v_w"]).astype(bf16),
        bv=params["v_b"].reshape(1, D).astype(f32),
        wo=tw(params["o_w"]).astype(bf16),
        bo=params["o_b"].reshape(1, D).astype(f32),
        w1=tw(params["ff1_w"]).astype(bf16),
        b1=params["ff1_b"].reshape(1, -1).astype(f32),
        w2=tw(params["ff2_w"]).astype(bf16),
        b2=params["ff2_b"].reshape(1, D).astype(f32),
        cos=jnp.tile(cos_hs, (1, n_heads)),         # (L, D)
        sin=jnp.tile(sin_hs, (1, n_heads)),
    )


# ----------------------------------------------------------------------------
# Wrapper: two pallas_calls (QKV/RoPE precompute, then attention + FFN)
# ----------------------------------------------------------------------------
def encoder_layer(x, encoder_mask, prep):
    """Fused EncoderLayer forward (eval mode).

    x:            (B, T, D) float32
    encoder_mask: (B, T) bool, True = attend (key-side padding mask)
    prep:         output of prepare_params(params, n_heads)
    """
    B, T, D = x.shape
    H, hs = prep["n_heads"], prep["head_size"]
    cfg = _gen_config()
    f32 = jnp.float32

    # ---- pad T so every block is a full tile (no TQ=T fallback) ----
    TQ = cfg["tq"]
    T_pad = _round_up(T, 16)
    if T_pad > TQ:
        T_pad = _round_up(T_pad, TQ)
    else:
        TQ = T_pad
    S = T_pad
    n_tq = T_pad // TQ
    assert T_pad <= prep["max_seq_len"], "sequence longer than RoPE table"

    x_p = jnp.pad(x.astype(f32), ((0, 0), (0, T_pad - T), (0, 0)))
    mask_p = jnp.pad(encoder_mask, ((0, 0), (0, T_pad - T)))   # pads with False
    mask_f = mask_p.astype(f32).reshape(B, 1, S)
    cos = prep["cos"][:T_pad]
    sin = prep["sin"][:T_pad]

    cparams = pltpu.CompilerParams(
        dimension_semantics=("parallel", "parallel"),
        vmem_limit_bytes=cfg["vmem_limit"])

    def const_spec(p, single):
        # weights never change across grid steps -> one VMEM buffer each
        if single:
            return pl.BlockSpec(p.shape, lambda b, t: (0, 0),
                                pipeline_mode=pl.Buffered(buffer_count=1))
        return pl.BlockSpec(p.shape, lambda b, t: (0, 0))

    # ---------------- pass 1: LN1 + q/k/v projections + RoPE ----------------
    qkv_weights = (prep["ln1_g"], prep["ln1_b"], prep["wq"], prep["bq"],
                   prep["wk"], prep["bk"], prep["wv"], prep["bv"])

    def build_qkv(single):
        in_specs = [
            pl.BlockSpec((1, TQ, D), lambda b, t: (b, t, 0)),    # x rows
            pl.BlockSpec((TQ, D), lambda b, t: (t, 0)),          # cos (full D)
            pl.BlockSpec((TQ, D), lambda b, t: (t, 0)),          # sin (full D)
        ] + [const_spec(p, single) for p in qkv_weights]
        return pl.pallas_call(
            partial(_qkv_rope_kernel, n_heads=H, head_size=hs),
            grid=(B, n_tq),
            in_specs=in_specs,
            out_specs=[pl.BlockSpec((1, TQ, D), lambda b, t: (b, t, 0))] * 3,
            out_shape=[jax.ShapeDtypeStruct((B, T_pad, D), jnp.bfloat16)] * 3,
            compiler_params=cparams,
        )

    qkv_args = (x_p, cos, sin) + qkv_weights
    try:
        q_rot, k_rot, v_all = build_qkv(True)(*qkv_args)
    except Exception:   # JAX build without BlockSpec pipeline_mode support
        q_rot, k_rot, v_all = build_qkv(False)(*qkv_args)

    # ---------------- pass 2: attention + output proj + FFN -----------------
    ffn_chunk = min(4 * D, 256)
    attn_weights = (prep["wo"], prep["bo"], prep["ln2_g"], prep["ln2_b"],
                    prep["w1"], prep["b1"], prep["w2"], prep["b2"])

    def build_attn(single):
        in_specs = [
            pl.BlockSpec((1, TQ, D), lambda b, t: (b, t, 0)),    # x (residual rows)
            pl.BlockSpec((1, TQ, D), lambda b, t: (b, t, 0)),    # q (post-RoPE bf16)
            pl.BlockSpec((1, S, D), lambda b, t: (b, 0, 0)),     # k (post-RoPE bf16)
            pl.BlockSpec((1, S, D), lambda b, t: (b, 0, 0)),     # v (bf16)
            pl.BlockSpec((1, 1, S), lambda b, t: (b, 0, 0)),     # key padding mask
        ] + [const_spec(p, single) for p in attn_weights]
        return pl.pallas_call(
            partial(_attn_ffn_kernel, n_heads=H, head_size=hs,
                    ffn_chunk=ffn_chunk, softmax_bf16=cfg["softmax_bf16"]),
            grid=(B, n_tq),
            in_specs=in_specs,
            out_specs=pl.BlockSpec((1, TQ, D), lambda b, t: (b, t, 0)),
            out_shape=jax.ShapeDtypeStruct((B, T_pad, D), x.dtype),
            scratch_shapes=[pltpu.VMEM((TQ, D), jnp.bfloat16),   # per-head attn acc
                            pltpu.VMEM((TQ, D), jnp.float32)],   # FFN accumulator
            compiler_params=cparams,
        )

    attn_args = (x_p, q_rot, k_rot, v_all, mask_f) + attn_weights
    try:
        out = build_attn(True)(*attn_args)
    except Exception:
        out = build_attn(False)(*attn_args)

    return out[:, :T, :]


# ----------------------------------------------------------------------------
# Pure-JAX f32 reference (exact PyTorch module semantics)
# ----------------------------------------------------------------------------
def encoder_layer_ref(x, encoder_mask, params, n_heads):
    B, T, D = x.shape
    hs = D // n_heads
    eps = 1e-5

    def ln(v, g, b):
        mu = jnp.mean(v, -1, keepdims=True)
        var = jnp.mean((v - mu) ** 2, -1, keepdims=True)
        return (v - mu) / jnp.sqrt(var + eps) * g + b

    def linear(v, w, b):           # torch layout: w (out, in), b (out,)
        return v @ w.T + b

    def rope_interleaved(v):       # (B, S, H, hs), torchtune convention
        _, S, _, d = v.shape
        half = d // 2
        theta = 1.0 / (10000.0 ** (jnp.arange(0, d, 2)[:half].astype(jnp.float32) / d))
        ang = jnp.arange(S, dtype=jnp.float32)[:, None] * theta[None, :]
        cos = jnp.cos(ang)[None, :, None, :]
        sin = jnp.sin(ang)[None, :, None, :]
        vr = v.reshape(*v.shape[:-1], half, 2)
        v0, v1 = vr[..., 0], vr[..., 1]
        out = jnp.stack([v0 * cos - v1 * sin, v1 * cos + v0 * sin], axis=-1)
        return out.reshape(v.shape)

    xn = ln(x, params["ln1_g"], params["ln1_b"])
    q = linear(xn, params["q_w"], params["q_b"]).reshape(B, T, n_heads, hs)
    k = linear(xn, params["k_w"], params["k_b"]).reshape(B, T, n_heads, hs)
    v = linear(xn, params["v_w"], params["v_b"]).reshape(B, T, n_heads, hs)
    q = jnp.transpose(rope_interleaved(q), (0, 2, 1, 3))
    k = jnp.transpose(rope_interleaved(k), (0, 2, 1, 3))
    v = jnp.transpose(v, (0, 2, 1, 3))
    s = jnp.einsum("bhtd,bhsd->bhts", q, k) / math.sqrt(hs)
    s = s + jnp.where(encoder_mask[:, None, None, :], 0.0, -1e30)
    p = jax.nn.softmax(s, axis=-1)
    attn = jnp.einsum("bhts,bhsd->bhtd", p, v)
    attn = jnp.transpose(attn, (0, 2, 1, 3)).reshape(B, T, D)
    x1 = x + linear(attn, params["o_w"], params["o_b"])
    x2 = ln(x1, params["ln2_g"], params["ln2_b"])
    h1 = jax.nn.relu(linear(x2, params["ff1_w"], params["ff1_b"]))
    return x1 + linear(h1, params["ff2_w"], params["ff2_b"])


if __name__ == "__main__":
    B, T, D, H = 2, 8, 128, 4       # D multiple of 128 -> lane-dense blocks/stores
    hs = D // H

    key = jax.random.PRNGKey(0)
    ks = jax.random.split(key, 2)
    x = jax.random.normal(ks[0], (B, T, D), jnp.float32)

    # key-side padding mask: second sequence padded after length 5
    lengths = jnp.array([T, 5])
    encoder_mask = jnp.arange(T)[None, :] < lengths[:, None]       # (B, T) bool

    def torch_linear(k, dout, din):
        kw, kb = jax.random.split(k)
        w = jax.random.normal(kw, (dout, din), jnp.float32) / math.sqrt(din)
        b = jax.random.normal(kb, (dout,), jnp.float32) * 0.02
        return w, b

    kq, kk, kv, ko, k1, k2, kl = jax.random.split(ks[1], 7)
    params = {}
    params["q_w"], params["q_b"] = torch_linear(kq, D, D)
    params["k_w"], params["k_b"] = torch_linear(kk, D, D)
    params["v_w"], params["v_b"] = torch_linear(kv, D, D)
    params["o_w"], params["o_b"] = torch_linear(ko, D, D)
    params["ff1_w"], params["ff1_b"] = torch_linear(k1, 4 * D, D)
    params["ff2_w"], params["ff2_b"] = torch_linear(k2, D, 4 * D)
    kg1, kb1, kg2, kb2 = jax.random.split(kl, 4)
    params["ln1_g"] = 1.0 + 0.1 * jax.random.normal(kg1, (D,), jnp.float32)
    params["ln1_b"] = 0.1 * jax.random.normal(kb1, (D,), jnp.float32)
    params["ln2_g"] = 1.0 + 0.1 * jax.random.normal(kg2, (D,), jnp.float32)
    params["ln2_b"] = 0.1 * jax.random.normal(kb2, (D,), jnp.float32)

    prep = prepare_params(params, n_heads=H, max_seq_len=4096)   # one-time prep
    out = encoder_layer(x, encoder_mask, prep)
    jax.block_until_ready(out)

    ref = encoder_layer_ref(x, encoder_mask, params, n_heads=H)
    err = float(jnp.max(jnp.abs(out - ref)))
    assert out.shape == (B, T, D)
    assert bool(jnp.all(jnp.isfinite(out)))
    assert err < 1e-1, f"kernel vs f32 reference max abs err = {err}"
    print("KERNEL_OK")
</pallas_src>

<mosaic_0001>
module attributes {stable_mosaic.version = 11 : i64} {
  func.func @_qkv_rope_kernel(%arg0: i32, %arg1: i32, %arg2: memref<1x16x128xf32, #tpu.memory_space<vmem>>, %arg3: memref<16x128xf32, #tpu.memory_space<vmem>>, %arg4: memref<16x128xf32, #tpu.memory_space<vmem>>, %arg5: memref<1x128xf32, #tpu.memory_space<vmem>>, %arg6: memref<1x128xf32, #tpu.memory_space<vmem>>, %arg7: memref<128x128xbf16, #tpu.memory_space<vmem>>, %arg8: memref<1x128xf32, #tpu.memory_space<vmem>>, %arg9: memref<128x128xbf16, #tpu.memory_space<vmem>>, %arg10: memref<1x128xf32, #tpu.memory_space<vmem>>, %arg11: memref<128x128xbf16, #tpu.memory_space<vmem>>, %arg12: memref<1x128xf32, #tpu.memory_space<vmem>>, %arg13: memref<1x16x128xbf16, #tpu.memory_space<vmem>>, %arg14: memref<1x16x128xbf16, #tpu.memory_space<vmem>>, %arg15: memref<1x16x128xbf16, #tpu.memory_space<vmem>>) attributes {dimension_semantics = [#tpu.dimension_semantics<parallel>, #tpu.dimension_semantics<parallel>], iteration_bounds = array<i64: 2, 1>, scalar_prefetch = 0 : i64, scratch_operands = 0 : i64, tpu.core_type = #tpu.core_type<tc>, window_params = [{transform_indices = @transform_0, window_bounds = array<i64: 1, 16, 128>}, {transform_indices = @transform_1, window_bounds = array<i64: 16, 128>}, {transform_indices = @transform_2, window_bounds = array<i64: 16, 128>}, {pipeline_mode = #tpu.pipeline_mode<synchronous>, transform_indices = @transform_3, window_bounds = array<i64: 1, 128>}, {pipeline_mode = #tpu.pipeline_mode<synchronous>, transform_indices = @transform_4, window_bounds = array<i64: 1, 128>}, {pipeline_mode = #tpu.pipeline_mode<synchronous>, transform_indices = @transform_5, window_bounds = array<i64: 128, 128>}, {pipeline_mode = #tpu.pipeline_mode<synchronous>, transform_indices = @transform_6, window_bounds = array<i64: 1, 128>}, {pipeline_mode = #tpu.pipeline_mode<synchronous>, transform_indices = @transform_7, window_bounds = array<i64: 128, 128>}, {pipeline_mode = #tpu.pipeline_mode<synchronous>, transform_indices = @transform_8, window_bounds = array<i64: 1, 128>}, {pipeline_mode = #tpu.pipeline_mode<synchronous>, transform_indices = @transform_9, window_bounds = array<i64: 128, 128>}, {pipeline_mode = #tpu.pipeline_mode<synchronous>, transform_indices = @transform_10, window_bounds = array<i64: 1, 128>}, {transform_indices = @transform_11, window_bounds = array<i64: 1, 16, 128>}, {transform_indices = @transform_12, window_bounds = array<i64: 1, 16, 128>}, {transform_indices = @transform_13, window_bounds = array<i64: 1, 16, 128>}]} {
    %c0 = arith.constant 0 : index
    %c0_0 = arith.constant 0 : index
    %c0_1 = arith.constant 0 : index
    %0 = vector.load %arg2[%c0, %c0_0, %c0_1] : memref<1x16x128xf32, #tpu.memory_space<vmem>>, vector<1x16x128xf32>
    %1 = vector.shape_cast %0 : vector<1x16x128xf32> to vector<16x128xf32>
    %cst = arith.constant dense<0.000000e+00> : vector<16xf32>
    %2 = vector.multi_reduction <add>, %1, %cst [1] : vector<16x128xf32> to vector<16xf32>
    %3 = vector.shape_cast %2 : vector<16xf32> to vector<16x1xf32>
    %cst_2 = arith.constant 1.280000e+02 : f32
    %4 = vector.broadcast %cst_2 : f32 to vector<16x1xf32>
    %5 = arith.divf %3, %4 : vector<16x1xf32>
    %6 = vector.broadcast %5 : vector<16x1xf32> to vector<16x128xf32>
    %7 = arith.subf %1, %6 : vector<16x128xf32>
    %8 = arith.mulf %7, %7 : vector<16x128xf32>
    %cst_3 = arith.constant dense<0.000000e+00> : vector<16xf32>
    %9 = vector.multi_reduction <add>, %8, %cst_3 [1] : vector<16x128xf32> to vector<16xf32>
    %10 = vector.shape_cast %9 : vector<16xf32> to vector<16x1xf32>
    %cst_4 = arith.constant 1.280000e+02 : f32
    %11 = vector.broadcast %cst_4 : f32 to vector<16x1xf32>
    %12 = arith.divf %10, %11 : vector<16x1xf32>
    %13 = vector.broadcast %5 : vector<16x1xf32> to vector<16x128xf32>
    %14 = arith.subf %1, %13 : vector<16x128xf32>
    %cst_5 = arith.constant 9.99999974E-6 : f32
    %15 = vector.broadcast %cst_5 : f32 to vector<16x1xf32>
    %16 = arith.addf %12, %15 : vector<16x1xf32>
    %17 = math.rsqrt %16 : vector<16x1xf32>
    %18 = vector.broadcast %17 : vector<16x1xf32> to vector<16x128xf32>
    %19 = arith.mulf %14, %18 : vector<16x128xf32>
    %c0_6 = arith.constant 0 : index
    %c0_7 = arith.constant 0 : index
    %20 = vector.load %arg5[%c0_6, %c0_7] : memref<1x128xf32, #tpu.memory_space<vmem>>, vector<1x128xf32>
    %21 = vector.broadcast %20 : vector<1x128xf32> to vector<16x128xf32>
    %22 = arith.mulf %19, %21 : vector<16x128xf32>
    %c0_8 = arith.constant 0 : index
    %c0_9 = arith.constant 0 : index
    %23 = vector.load %arg6[%c0_8, %c0_9] : memref<1x128xf32, #tpu.memory_space<vmem>>, vector<1x128xf32>
    %24 = vector.broadcast %23 : vector<1x128xf32> to vector<16x128xf32>
    %25 = arith.addf %22, %24 : vector<16x128xf32>
    %26 = arith.truncf %25 : vector<16x128xf32> to vector<16x128xbf16>
    %c0_10 = arith.constant 0 : index
    %c0_11 = arith.constant 0 : index
    %27 = vector.load %arg7[%c0_10, %c0_11] : memref<128x128xbf16, #tpu.memory_space<vmem>>, vector<128x128xbf16>
    %cst_12 = arith.constant dense<0.000000e+00> : vector<16x128xf32>
    %28 = tpu.matmul %26, %27, %cst_12 {dimension_numbers = #tpu.dot_dimension_numbers<[1], [0], [0], [1], [0, 0, 1, 1], [], []>} : vector<16x128xbf16>, vector<128x128xbf16>, vector<16x128xf32> -> vector<16x128xf32>
    %c0_13 = arith.constant 0 : index
    %c0_14 = arith.constant 0 : index
    %29 = vector.load %arg8[%c0_13, %c0_14] : memref<1x128xf32, #tpu.memory_space<vmem>>, vector<1x128xf32>
    %30 = vector.broadcast %29 : vector<1x128xf32> to vector<16x128xf32>
    %31 = arith.addf %28, %30 : vector<16x128xf32>
    %c0_15 = arith.constant 0 : index
    %c0_16 = arith.constant 0 : index
    %32 = vector.load %arg9[%c0_15, %c0_16] : memref<128x128xbf16, #tpu.memory_space<vmem>>, vector<128x128xbf16>
    %cst_17 = arith.constant dense<0.000000e+00> : vector<16x128xf32>
    %33 = tpu.matmul %26, %32, %cst_17 {dimension_numbers = #tpu.dot_dimension_numbers<[1], [0], [0], [1], [0, 0, 1, 1], [], []>} : vector<16x128xbf16>, vector<128x128xbf16>, vector<16x128xf32> -> vector<16x128xf32>
    %c0_18 = arith.constant 0 : index
    %c0_19 = arith.constant 0 : index
    %34 = vector.load %arg10[%c0_18, %c0_19] : memref<1x128xf32, #tpu.memory_space<vmem>>, vector<1x128xf32>
    %35 = vector.broadcast %34 : vector<1x128xf32> to vector<16x128xf32>
    %36 = arith.addf %33, %35 : vector<16x128xf32>
    %c0_20 = arith.constant 0 : index
    %c0_21 = arith.constant 0 : index
    %37 = vector.load %arg11[%c0_20, %c0_21] : memref<128x128xbf16, #tpu.memory_space<vmem>>, vector<128x128xbf16>
    %cst_22 = arith.constant dense<0.000000e+00> : vector<16x128xf32>
    %38 = tpu.matmul %26, %37, %cst_22 {dimension_numbers = #tpu.dot_dimension_numbers<[1], [0], [0], [1], [0, 0, 1, 1], [], []>} : vector<16x128xbf16>, vector<128x128xbf16>, vector<16x128xf32> -> vector<16x128xf32>
    %c0_23 = arith.constant 0 : index
    %c0_24 = arith.constant 0 : index
    %39 = vector.load %arg12[%c0_23, %c0_24] : memref<1x128xf32, #tpu.memory_space<vmem>>, vector<1x128xf32>
    %40 = vector.broadcast %39 : vector<1x128xf32> to vector<16x128xf32>
    %41 = arith.addf %38, %40 : vector<16x128xf32>
    %c0_25 = arith.constant 0 : index
    %c0_26 = arith.constant 0 : index
    %42 = vector.load %arg3[%c0_25, %c0_26] : memref<16x128xf32, #tpu.memory_space<vmem>>, vector<16x128xf32>
    %c0_27 = arith.constant 0 : index
    %c0_28 = arith.constant 0 : index
    %43 = vector.load %arg4[%c0_27, %c0_28] : memref<16x128xf32, #tpu.memory_space<vmem>>, vector<16x128xf32>
    %44 = vector.extract_strided_slice %31 {offsets = [0, 16], sizes = [16, 16], strides = [1, 1]} : vector<16x128xf32> to vector<16x16xf32>
    %cst_29 = arith.constant 0.000000e+00 : f32
    %45 = vector.broadcast %cst_29 : f32 to vector<16x16xf32>
    %46 = arith.subf %45, %44 : vector<16x16xf32>
    %47 = vector.extract_strided_slice %31 {offsets = [0, 0], sizes = [16, 16], strides = [1, 1]} : vector<16x128xf32> to vector<16x16xf32>
    %48 = vector.extract_strided_slice %31 {offsets = [0, 48], sizes = [16, 16], strides = [1, 1]} : vector<16x128xf32> to vector<16x16xf32>
    %cst_30 = arith.constant 0.000000e+00 : f32
    %49 = vector.broadcast %cst_30 : f32 to vector<16x16xf32>
    %50 = arith.subf %49, %48 : vector<16x16xf32>
    %51 = vector.extract_strided_slice %31 {offsets = [0, 32], sizes = [16, 16], strides = [1, 1]} : vector<16x128xf32> to vector<16x16xf32>
    %52 = vector.extract_strided_slice %31 {offsets = [0, 80], sizes = [16, 16], strides = [1, 1]} : vector<16x128xf32> to vector<16x16xf32>
    %cst_31 = arith.constant 0.000000e+00 : f32
    %53 = vector.broadcast %cst_31 : f32 to vector<16x16xf32>
    %54 = arith.subf %53, %52 : vector<16x16xf32>
    %55 = vector.extract_strided_slice %31 {offsets = [0, 64], sizes = [16, 16], strides = [1, 1]} : vector<16x128xf32> to vector<16x16xf32>
    %56 = vector.extract_strided_slice %31 {offsets = [0, 112], sizes = [16, 16], strides = [1, 1]} : vector<16x128xf32> to vector<16x16xf32>
    %cst_32 = arith.constant 0.000000e+00 : f32
    %57 = vector.broadcast %cst_32 : f32 to vector<16x16xf32>
    %58 = arith.subf %57, %56 : vector<16x16xf32>
    %59 = vector.extract_strided_slice %31 {offsets = [0, 96], sizes = [16, 16], strides = [1, 1]} : vector<16x128xf32> to vector<16x16xf32>
    %60 = tpu.concatenate %46, %47, %50, %51, %54, %55, %58, %59 in 1 : vector<16x16xf32>, vector<16x16xf32>, vector<16x16xf32>, vector<16x16xf32>, vector<16x16xf32>, vector<16x16xf32>, vector<16x16xf32>, vector<16x16xf32> -> vector<16x128xf32>
    %61 = arith.mulf %31, %42 : vector<16x128xf32>
    %62 = arith.mulf %60, %43 : vector<16x128xf32>
    %63 = arith.addf %61, %62 : vector<16x128xf32>
    %64 = arith.truncf %63 : vector<16x128xf32> to vector<16x128xbf16>
    %c0_33 = arith.constant 0 : index
    %c0_34 = arith.constant 0 : index
    %c0_35 = arith.constant 0 : index
    %65 = vector.load %arg13[%c0_33, %c0_34, %c0_35] : memref<1x16x128xbf16, #tpu.memory_space<vmem>>, vector<1x16x128xbf16>
    %66 = vector.shape_cast %65 : vector<1x16x128xbf16> to vector<16x128xbf16>
    %67 = vector.shape_cast %64 : vector<16x128xbf16> to vector<1x16x128xbf16>
    tpu.vector_store %arg13[%c0_33, %c0_34, %c0_35], %67 {strides = array<i32>} : memref<1x16x128xbf16, #tpu.memory_space<vmem>>, vector<1x16x128xbf16>,
    %68 = vector.extract_strided_slice %36 {offsets = [0, 16], sizes = [16, 16], strides = [1, 1]} : vector<16x128xf32> to vector<16x16xf32>
    %cst_36 = arith.constant 0.000000e+00 : f32
    %69 = vector.broadcast %cst_36 : f32 to vector<16x16xf32>
    %70 = arith.subf %69, %68 : vector<16x16xf32>
    %71 = vector.extract_strided_slice %36 {offsets = [0, 0], sizes = [16, 16], strides = [1, 1]} : vector<16x128xf32> to vector<16x16xf32>
    %72 = vector.extract_strided_slice %36 {offsets = [0, 48], sizes = [16, 16], strides = [1, 1]} : vector<16x128xf32> to vector<16x16xf32>
    %cst_37 = arith.constant 0.000000e+00 : f32
    %73 = vector.broadcast %cst_37 : f32 to vector<16x16xf32>
    %74 = arith.subf %73, %72 : vector<16x16xf32>
    %75 = vector.extract_strided_slice %36 {offsets = [0, 32], sizes = [16, 16], strides = [1, 1]} : vector<16x128xf32> to vector<16x16xf32>
    %76 = vector.extract_strided_slice %36 {offsets = [0, 80], sizes = [16, 16], strides = [1, 1]} : vector<16x128xf32> to vector<16x16xf32>
    %cst_38 = arith.constant 0.000000e+00 : f32
    %77 = vector.broadcast %cst_38 : f32 to vector<16x16xf32>
    %78 = arith.subf %77, %76 : vector<16x16xf32>
    %79 = vector.extract_strided_slice %36 {offsets = [0, 64], sizes = [16, 16], strides = [1, 1]} : vector<16x128xf32> to vector<16x16xf32>
    %80 = vector.extract_strided_slice %36 {offsets = [0, 112], sizes = [16, 16], strides = [1, 1]} : vector<16x128xf32> to vector<16x16xf32>
    %cst_39 = arith.constant 0.000000e+00 : f32
    %81 = vector.broadcast %cst_39 : f32 to vector<16x16xf32>
    %82 = arith.subf %81, %80 : vector<16x16xf32>
    %83 = vector.extract_strided_slice %36 {offsets = [0, 96], sizes = [16, 16], strides = [1, 1]} : vector<16x128xf32> to vector<16x16xf32>
    %84 = tpu.concatenate %70, %71, %74, %75, %78, %79, %82, %83 in 1 : vector<16x16xf32>, vector<16x16xf32>, vector<16x16xf32>, vector<16x16xf32>, vector<16x16xf32>, vector<16x16xf32>, vector<16x16xf32>, vector<16x16xf32> -> vector<16x128xf32>
    %85 = arith.mulf %36, %42 : vector<16x128xf32>
    %86 = arith.mulf %84, %43 : vector<16x128xf32>
    %87 = arith.addf %85, %86 : vector<16x128xf32>
    %88 = arith.truncf %87 : vector<16x128xf32> to vector<16x128xbf16>
    %c0_40 = arith.constant 0 : index
    %c0_41 = arith.constant 0 : index
    %c0_42 = arith.constant 0 : index
    %89 = vector.load %arg14[%c0_40, %c0_41, %c0_42] : memref<1x16x128xbf16, #tpu.memory_space<vmem>>, vector<1x16x128xbf16>
    %90 = vector.shape_cast %89 : vector<1x16x128xbf16> to vector<16x128xbf16>
    %91 = vector.shape_cast %88 : vector<16x128xbf16> to vector<1x16x128xbf16>
    tpu.vector_store %arg14[%c0_40, %c0_41, %c0_42], %91 {strides = array<i32>} : memref<1x16x128xbf16, #tpu.memory_space<vmem>>, vector<1x16x128xbf16>,
    %92 = arith.truncf %41 : vector<16x128xf32> to vector<16x128xbf16>
    %c0_43 = arith.constant 0 : index
    %c0_44 = arith.constant 0 : index
    %c0_45 = arith.constant 0 : index
    %93 = vector.load %arg15[%c0_43, %c0_44, %c0_45] : memref<1x16x128xbf16, #tpu.memory_space<vmem>>, vector<1x16x128xbf16>
    %94 = vector.shape_cast %93 : vector<1x16x128xbf16> to vector<16x128xbf16>
    %95 = vector.shape_cast %92 : vector<16x128xbf16> to vector<1x16x128xbf16>
    tpu.vector_store %arg15[%c0_43, %c0_44, %c0_45], %95 {strides = array<i32>} : memref<1x16x128xbf16, #tpu.memory_space<vmem>>, vector<1x16x128xbf16>,
    return
  }
  func.func @transform_0(%arg0: i32, %arg1: i32) -> (i32, i32, i32) {
    %c0_i32 = arith.constant 0 : i32
    %c0_i32_0 = arith.constant 0 : i32
    return %arg0, %arg1, %c0_i32 : i32, i32, i32
  }
  func.func @transform_1(%arg0: i32, %arg1: i32) -> (i32, i32) {
    %c0_i32 = arith.constant 0 : i32
    %c0_i32_0 = arith.constant 0 : i32
    return %arg1, %c0_i32 : i32, i32
  }
  func.func @transform_2(%arg0: i32, %arg1: i32) -> (i32, i32) {
    %c0_i32 = arith.constant 0 : i32
    %c0_i32_0 = arith.constant 0 : i32
    return %arg1, %c0_i32 : i32, i32
  }
  func.func @transform_3(%arg0: i32, %arg1: i32) -> (i32, i32) {
    %c0_i32 = arith.constant 0 : i32
    %c0_i32_0 = arith.constant 0 : i32
    %c0_i32_1 = arith.constant 0 : i32
    return %c0_i32, %c0_i32_0 : i32, i32
  }
  func.func @transform_4(%arg0: i32, %arg1: i32) -> (i32, i32) {
    %c0_i32 = arith.constant 0 : i32
    %c0_i32_0 = arith.constant 0 : i32
    %c0_i32_1 = arith.constant 0 : i32
    return %c0_i32, %c0_i32_0 : i32, i32
  }
  func.func @transform_5(%arg0: i32, %arg1: i32) -> (i32, i32) {
    %c0_i32 = arith.constant 0 : i32
    %c0_i32_0 = arith.constant 0 : i32
    %c0_i32_1 = arith.constant 0 : i32
    return %c0_i32, %c0_i32_0 : i32, i32
  }
  func.func @transform_6(%arg0: i32, %arg1: i32) -> (i32, i32) {
    %c0_i32 = arith.constant 0 : i32
    %c0_i32_0 = arith.constant 0 : i32
    %c0_i32_1 = arith.constant 0 : i32
    return %c0_i32, %c0_i32_0 : i32, i32
  }
  func.func @transform_7(%arg0: i32, %arg1: i32) -> (i32, i32) {
    %c0_i32 = arith.constant 0 : i32
    %c0_i32_0 = arith.constant 0 : i32
    %c0_i32_1 = arith.constant 0 : i32
    return %c0_i32, %c0_i32_0 : i32, i32
  }
  func.func @transform_8(%arg0: i32, %arg1: i32) -> (i32, i32) {
    %c0_i32 = arith.constant 0 : i32
    %c0_i32_0 = arith.constant 0 : i32
    %c0_i32_1 = arith.constant 0 : i32
    return %c0_i32, %c0_i32_0 : i32, i32
  }
  func.func @transform_9(%arg0: i32, %arg1: i32) -> (i32, i32) {
    %c0_i32 = arith.constant 0 : i32
    %c0_i32_0 = arith.constant 0 : i32
    %c0_i32_1 = arith.constant 0 : i32
    return %c0_i32, %c0_i32_0 : i32, i32
  }
  func.func @transform_10(%arg0: i32, %arg1: i32) -> (i32, i32) {
    %c0_i32 = arith.constant 0 : i32
    %c0_i32_0 = arith.constant 0 : i32
    %c0_i32_1 = arith.constant 0 : i32
    return %c0_i32, %c0_i32_0 : i32, i32
  }
  func.func @transform_11(%arg0: i32, %arg1: i32) -> (i32, i32, i32) {
    %c0_i32 = arith.constant 0 : i32
    %c0_i32_0 = arith.constant 0 : i32
    return %arg0, %arg1, %c0_i32 : i32, i32, i32
  }
  func.func @transform_12(%arg0: i32, %arg1: i32) -> (i32, i32, i32) {
    %c0_i32 = arith.constant 0 : i32
    %c0_i32_0 = arith.constant 0 : i32
    return %arg0, %arg1, %c0_i32 : i32, i32, i32
  }
  func.func @transform_13(%arg0: i32, %arg1: i32) -> (i32, i32, i32) {
    %c0_i32 = arith.constant 0 : i32
    %c0_i32_0 = arith.constant 0 : i32
    return %arg0, %arg1, %c0_i32 : i32, i32, i32
  }
}

module attributes {stable_mosaic.version = 11 : i64} {
  func.func @_qkv_rope_kernel(%arg0: i32, %arg1: i32, %arg2: memref<1x16x128xf32, #tpu.memory_space<vmem>>, %arg3: memref<16x128xf32, #tpu.memory_space<vmem>>, %arg4: memref<16x128xf32, #tpu.memory_space<vmem>>, %arg5: memref<1x128xf32, #tpu.memory_space<vmem>>, %arg6: memref<1x128xf32, #tpu.memory_space<vmem>>, %arg7: memref<128x128xbf16, #tpu.memory_space<vmem>>, %arg8: memref<1x128xf32, #tpu.memory_space<vmem>>, %arg9: memref<128x128xbf16, #tpu.memory_space<vmem>>, %arg10: memref<1x128xf32, #tpu.memory_space<vmem>>, %arg11: memref<128x128xbf16, #tpu.memory_space<vmem>>, %arg12: memref<1x128xf32, #tpu.memory_space<vmem>>, %arg13: memref<1x16x128xbf16, #tpu.memory_space<vmem>>, %arg14: memref<1x16x128xbf16, #tpu.memory_space<vmem>>, %arg15: memref<1x16x128xbf16, #tpu.memory_space<vmem>>) attributes {dimension_semantics = [#tpu.dimension_semantics<parallel>, #tpu.dimension_semantics<parallel>], iteration_bounds = array<i64: 2, 1>, scalar_prefetch = 0 : i64, scratch_operands = 0 : i64, tpu.core_type = #tpu.core_type<tc>, window_params = [{transform_indices = @transform_0, window_bounds = array<i64: 1, 16, 128>}, {transform_indices = @transform_1, window_bounds = array<i64: 16, 128>}, {transform_indices = @transform_2, window_bounds = array<i64: 16, 128>}, {pipeline_mode = #tpu.pipeline_mode<synchronous>, transform_indices = @transform_3, window_bounds = array<i64: 1, 128>}, {pipeline_mode = #tpu.pipeline_mode<synchronous>, transform_indices = @transform_4, window_bounds = array<i64: 1, 128>}, {pipeline_mode = #tpu.pipeline_mode<synchronous>, transform_indices = @transform_5, window_bounds = array<i64: 128, 128>}, {pipeline_mode = #tpu.pipeline_mode<synchronous>, transform_indices = @transform_6, window_bounds = array<i64: 1, 128>}, {pipeline_mode = #tpu.pipeline_mode<synchronous>, transform_indices = @transform_7, window_bounds = array<i64: 128, 128>}, {pipeline_mode = #tpu.pipeline_mode<synchronous>, transform_indices = @transform_8, window_bounds = array<i64: 1, 128>}, {pipeline_mode = #tpu.pipeline_mode<synchronous>, transform_indices = @transform_9, window_bounds = array<i64: 128, 128>}, {pipeline_mode = #tpu.pipeline_mode<synchronous>, transform_indices = @transform_10, window_bounds = array<i64: 1, 128>}, {transform_indices = @transform_11, window_bounds = array<i64: 1, 16, 128>}, {transform_indices = @transform_12, window_bounds = array<i64: 1, 16, 128>}, {transform_indices = @transform_13, window_bounds = array<i64: 1, 16, 128>}]} {
    %c0 = arith.constant 0 : index
    %c0_0 = arith.constant 0 : index
    %c0_1 = arith.constant 0 : index
    %0 = vector.load %arg2[%c0, %c0_0, %c0_1] : memref<1x16x128xf32, #tpu.memory_space<vmem>>, vector<1x16x128xf32>
    %1 = vector.shape_cast %0 : vector<1x16x128xf32> to vector<16x128xf32>
    %cst = arith.constant dense<0.000000e+00> : vector<16xf32>
    %2 = vector.multi_reduction <add>, %1, %cst [1] : vector<16x128xf32> to vector<16xf32>
    %3 = vector.shape_cast %2 : vector<16xf32> to vector<16x1xf32>
    %cst_2 = arith.constant 1.280000e+02 : f32
    %4 = vector.broadcast %cst_2 : f32 to vector<16x1xf32>
    %5 = arith.divf %3, %4 : vector<16x1xf32>
    %6 = vector.broadcast %5 : vector<16x1xf32> to vector<16x128xf32>
    %7 = arith.subf %1, %6 : vector<16x128xf32>
    %8 = arith.mulf %7, %7 : vector<16x128xf32>
    %cst_3 = arith.constant dense<0.000000e+00> : vector<16xf32>
    %9 = vector.multi_reduction <add>, %8, %cst_3 [1] : vector<16x128xf32> to vector<16xf32>
    %10 = vector.shape_cast %9 : vector<16xf32> to vector<16x1xf32>
    %cst_4 = arith.constant 1.280000e+02 : f32
    %11 = vector.broadcast %cst_4 : f32 to vector<16x1xf32>
    %12 = arith.divf %10, %11 : vector<16x1xf32>
    %13 = vector.broadcast %5 : vector<16x1xf32> to vector<16x128xf32>
    %14 = arith.subf %1, %13 : vector<16x128xf32>
    %cst_5 = arith.constant 9.99999974E-6 : f32
    %15 = vector.broadcast %cst_5 : f32 to vector<16x1xf32>
    %16 = arith.addf %12, %15 : vector<16x1xf32>
    %17 = math.rsqrt %16 : vector<16x1xf32>
    %18 = vector.broadcast %17 : vector<16x1xf32> to vector<16x128xf32>
    %19 = arith.mulf %14, %18 : vector<16x128xf32>
    %c0_6 = arith.constant 0 : index
    %c0_7 = arith.constant 0 : index
    %20 = vector.load %arg5[%c0_6, %c0_7] : memref<1x128xf32, #tpu.memory_space<vmem>>, vector<1x128xf32>
    %21 = vector.broadcast %20 : vector<1x128xf32> to vector<16x128xf32>
    %22 = arith.mulf %19, %21 : vector<16x128xf32>
    %c0_8 = arith.constant 0 : index
    %c0_9 = arith.constant 0 : index
    %23 = vector.load %arg6[%c0_8, %c0_9] : memref<1x128xf32, #tpu.memory_space<vmem>>, vector<1x128xf32>
    %24 = vector.broadcast %23 : vector<1x128xf32> to vector<16x128xf32>
    %25 = arith.addf %22, %24 : vector<16x128xf32>
    %26 = arith.truncf %25 : vector<16x128xf32> to vector<16x128xbf16>
    %c0_10 = arith.constant 0 : index
    %c0_11 = arith.constant 0 : index
    %27 = vector.load %arg7[%c0_10, %c0_11] : memref<128x128xbf16, #tpu.memory_space<vmem>>, vector<128x128xbf16>
    %cst_12 = arith.constant dense<0.000000e+00> : vector<16x128xf32>
    %28 = tpu.matmul %26, %27, %cst_12 {dimension_numbers = #tpu.dot_dimension_numbers<[1], [0], [0], [1], [0, 0, 1, 1], [], []>} : vector<16x128xbf16>, vector<128x128xbf16>, vector<16x128xf32> -> vector<16x128xf32>
    %c0_13 = arith.constant 0 : index
    %c0_14 = arith.constant 0 : index
    %29 = vector.load %arg8[%c0_13, %c0_14] : memref<1x128xf32, #tpu.memory_space<vmem>>, vector<1x128xf32>
    %30 = vector.broadcast %29 : vector<1x128xf32> to vector<16x128xf32>
    %31 = arith.addf %28, %30 : vector<16x128xf32>
    %c0_15 = arith.constant 0 : index
    %c0_16 = arith.constant 0 : index
    %32 = vector.load %arg9[%c0_15, %c0_16] : memref<128x128xbf16, #tpu.memory_space<vmem>>, vector<128x128xbf16>
    %cst_17 = arith.constant dense<0.000000e+00> : vector<16x128xf32>
    %33 = tpu.matmul %26, %32, %cst_17 {dimension_numbers = #tpu.dot_dimension_numbers<[1], [0], [0], [1], [0, 0, 1, 1], [], []>} : vector<16x128xbf16>, vector<128x128xbf16>, vector<16x128xf32> -> vector<16x128xf32>
    %c0_18 = arith.constant 0 : index
    %c0_19 = arith.constant 0 : index
    %34 = vector.load %arg10[%c0_18, %c0_19] : memref<1x128xf32, #tpu.memory_space<vmem>>, vector<1x128xf32>
    %35 = vector.broadcast %34 : vector<1x128xf32> to vector<16x128xf32>
    %36 = arith.addf %33, %35 : vector<16x128xf32>
    %c0_20 = arith.constant 0 : index
    %c0_21 = arith.constant 0 : index
    %37 = vector.load %arg11[%c0_20, %c0_21] : memref<128x128xbf16, #tpu.memory_space<vmem>>, vector<128x128xbf16>
    %cst_22 = arith.constant dense<0.000000e+00> : vector<16x128xf32>
    %38 = tpu.matmul %26, %37, %cst_22 {dimension_numbers = #tpu.dot_dimension_numbers<[1], [0], [0], [1], [0, 0, 1, 1], [], []>} : vector<16x128xbf16>, vector<128x128xbf16>, vector<16x128xf32> -> vector<16x128xf32>
    %c0_23 = arith.constant 0 : index
    %c0_24 = arith.constant 0 : index
    %39 = vector.load %arg12[%c0_23, %c0_24] : memref<1x128xf32, #tpu.memory_space<vmem>>, vector<1x128xf32>
    %40 = vector.broadcast %39 : vector<1x128xf32> to vector<16x128xf32>
    %41 = arith.addf %38, %40 : vector<16x128xf32>
    %c0_25 = arith.constant 0 : index
    %c0_26 = arith.constant 0 : index
    %42 = vector.load %arg3[%c0_25, %c0_26] : memref<16x128xf32, #tpu.memory_space<vmem>>, vector<16x128xf32>
    %c0_27 = arith.constant 0 : index
    %c0_28 = arith.constant 0 : index
    %43 = vector.load %arg4[%c0_27, %c0_28] : memref<16x128xf32, #tpu.memory_space<vmem>>, vector<16x128xf32>
    %44 = vector.extract_strided_slice %31 {offsets = [0, 16], sizes = [16, 16], strides = [1, 1]} : vector<16x128xf32> to vector<16x16xf32>
    %cst_29 = arith.constant 0.000000e+00 : f32
    %45 = vector.broadcast %cst_29 : f32 to vector<16x16xf32>
    %46 = arith.subf %45, %44 : vector<16x16xf32>
    %47 = vector.extract_strided_slice %31 {offsets = [0, 0], sizes = [16, 16], strides = [1, 1]} : vector<16x128xf32> to vector<16x16xf32>
    %48 = vector.extract_strided_slice %31 {offsets = [0, 48], sizes = [16, 16], strides = [1, 1]} : vector<16x128xf32> to vector<16x16xf32>
    %cst_30 = arith.constant 0.000000e+00 : f32
    %49 = vector.broadcast %cst_30 : f32 to vector<16x16xf32>
    %50 = arith.subf %49, %48 : vector<16x16xf32>
    %51 = vector.extract_strided_slice %31 {offsets = [0, 32], sizes = [16, 16], strides = [1, 1]} : vector<16x128xf32> to vector<16x16xf32>
    %52 = vector.extract_strided_slice %31 {offsets = [0, 80], sizes = [16, 16], strides = [1, 1]} : vector<16x128xf32> to vector<16x16xf32>
    %cst_31 = arith.constant 0.000000e+00 : f32
    %53 = vector.broadcast %cst_31 : f32 to vector<16x16xf32>
    %54 = arith.subf %53, %52 : vector<16x16xf32>
    %55 = vector.extract_strided_slice %31 {offsets = [0, 64], sizes = [16, 16], strides = [1, 1]} : vector<16x128xf32> to vector<16x16xf32>
    %56 = vector.extract_strided_slice %31 {offsets = [0, 112], sizes = [16, 16], strides = [1, 1]} : vector<16x128xf32> to vector<16x16xf32>
    %cst_32 = arith.constant 0.000000e+00 : f32
    %57 = vector.broadcast %cst_32 : f32 to vector<16x16xf32>
    %58 = arith.subf %57, %56 : vector<16x16xf32>
    %59 = vector.extract_strided_slice %31 {offsets = [0, 96], sizes = [16, 16], strides = [1, 1]} : vector<16x128xf32> to vector<16x16xf32>
    %60 = tpu.concatenate %46, %47, %50, %51, %54, %55, %58, %59 in 1 : vector<16x16xf32>, vector<16x16xf32>, vector<16x16xf32>, vector<16x16xf32>, vector<16x16xf32>, vector<16x16xf32>, vector<16x16xf32>, vector<16x16xf32> -> vector<16x128xf32>
    %61 = arith.mulf %31, %42 : vector<16x128xf32>
    %62 = arith.mulf %60, %43 : vector<16x128xf32>
    %63 = arith.addf %61, %62 : vector<16x128xf32>
    %64 = arith.truncf %63 : vector<16x128xf32> to vector<16x128xbf16>
    %c0_33 = arith.constant 0 : index
    %c0_34 = arith.constant 0 : index
    %c0_35 = arith.constant 0 : index
    %65 = vector.load %arg13[%c0_33, %c0_34, %c0_35] : memref<1x16x128xbf16, #tpu.memory_space<vmem>>, vector<1x16x128xbf16>
    %66 = vector.shape_cast %65 : vector<1x16x128xbf16> to vector<16x128xbf16>
    %67 = vector.shape_cast %64 : vector<16x128xbf16> to vector<1x16x128xbf16>
    tpu.vector_store %arg13[%c0_33, %c0_34, %c0_35], %67 {strides = array<i32>} : memref<1x16x128xbf16, #tpu.memory_space<vmem>>, vector<1x16x128xbf16>,
    %68 = vector.extract_strided_slice %36 {offsets = [0, 16], sizes = [16, 16], strides = [1, 1]} : vector<16x128xf32> to vector<16x16xf32>
    %cst_36 = arith.constant 0.000000e+00 : f32
    %69 = vector.broadcast %cst_36 : f32 to vector<16x16xf32>
    %70 = arith.subf %69, %68 : vector<16x16xf32>
    %71 = vector.extract_strided_slice %36 {offsets = [0, 0], sizes = [16, 16], strides = [1, 1]} : vector<16x128xf32> to vector<16x16xf32>
    %72 = vector.extract_strided_slice %36 {offsets = [0, 48], sizes = [16, 16], strides = [1, 1]} : vector<16x128xf32> to vector<16x16xf32>
    %cst_37 = arith.constant 0.000000e+00 : f32
    %73 = vector.broadcast %cst_37 : f32 to vector<16x16xf32>
    %74 = arith.subf %73, %72 : vector<16x16xf32>
    %75 = vector.extract_strided_slice %36 {offsets = [0, 32], sizes = [16, 16], strides = [1, 1]} : vector<16x128xf32> to vector<16x16xf32>
    %76 = vector.extract_strided_slice %36 {offsets = [0, 80], sizes = [16, 16], strides = [1, 1]} : vector<16x128xf32> to vector<16x16xf32>
    %cst_38 = arith.constant 0.000000e+00 : f32
    %77 = vector.broadcast %cst_38 : f32 to vector<16x16xf32>
    %78 = arith.subf %77, %76 : vector<16x16xf32>
    %79 = vector.extract_strided_slice %36 {offsets = [0, 64], sizes = [16, 16], strides = [1, 1]} : vector<16x128xf32> to vector<16x16xf32>
    %80 = vector.extract_strided_slice %36 {offsets = [0, 112], sizes = [16, 16], strides = [1, 1]} : vector<16x128xf32> to vector<16x16xf32>
    %cst_39 = arith.constant 0.000000e+00 : f32
    %81 = vector.broadcast %cst_39 : f32 to vector<16x16xf32>
    %82 = arith.subf %81, %80 : vector<16x16xf32>
    %83 = vector.extract_strided_slice %36 {offsets = [0, 96], sizes = [16, 16], strides = [1, 1]} : vector<16x128xf32> to vector<16x16xf32>
    %84 = tpu.concatenate %70, %71, %74, %75, %78, %79, %82, %83 in 1 : vector<16x16xf32>, vector<16x16xf32>, vector<16x16xf32>, vector<16x16xf32>, vector<16x16xf32>, vector<16x16xf32>, vector<16x16xf32>, vector<16x16xf32> -> vector<16x128xf32>
    %85 = arith.mulf %36, %42 : vector<16x128xf32>
    %86 = arith.mulf %84, %43 : vector<16x128xf32>
    %87 = arith.addf %85, %86 : vector<16x128xf32>
    %88 = arith.truncf %87 : vector<16x128xf32> to vector<16x128xbf16>
    %c0_40 = arith.constant 0 : index
    %c0_41 = arith.constant 0 : index
    %c0_42 = arith.constant 0 : index
    %89 = vector.load %arg14[%c0_40, %c0_41, %c0_42] : memref<1x16x128xbf16, #tpu.memory_space<vmem>>, vector<1x16x128xbf16>
    %90 = vector.shape_cast %89 : vector<1x16x128xbf16> to vector<16x128xbf16>
    %91 = vector.shape_cast %88 : vector<16x128xbf16> to vector<1x16x128xbf16>
    tpu.vector_store %arg14[%c0_40, %c0_41, %c0_42], %91 {strides = array<i32>} : memref<1x16x128xbf16, #tpu.memory_space<vmem>>, vector<1x16x128xbf16>,
    %92 = arith.truncf %41 : vector<16x128xf32> to vector<16x128xbf16>
    %c0_43 = arith.constant 0 : index
    %c0_44 = arith.constant 0 : index
    %c0_45 = arith.constant 0 : index
    %93 = vector.load %arg15[%c0_43, %c0_44, %c0_45] : memref<1x16x128xbf16, #tpu.memory_space<vmem>>, vector<1x16x128xbf16>
    %94 = vector.shape_cast %93 : vector<1x16x128xbf16> to vector<16x128xbf16>
    %95 = vector.shape_cast %92 : vector<16x128xbf16> to vector<1x16x128xbf16>
    tpu.vector_store %arg15[%c0_43, %c0_44, %c0_45], %95 {strides = array<i32>} : memref<1x16x128xbf16, #tpu.memory_space<vmem>>, vector<1x16x128xbf16>,
    return
  }
  func.func @transform_0(%arg0: i32, %arg1: i32) -> (i32, i32, i32) {
    %c0_i32 = arith.constant 0 : i32
    %c0_i32_0 = arith.constant 0 : i32
    return %arg0, %arg1, %c0_i32 : i32, i32, i32
  }
  func.func @transform_1(%arg0: i32, %arg1: i32) -> (i32, i32) {
    %c0_i32 = arith.constant 0 : i32
    %c0_i32_0 = arith.constant 0 : i32
    return %arg1, %c0_i32 : i32, i32
  }
  func.func @transform_2(%arg0: i32, %arg1: i32) -> (i32, i32) {
    %c0_i32 = arith.constant 0 : i32
    %c0_i32_0 = arith.constant 0 : i32
    return %arg1, %c0_i32 : i32, i32
  }
  func.func @transform_3(%arg0: i32, %arg1: i32) -> (i32, i32) {
    %c0_i32 = arith.constant 0 : i32
    %c0_i32_0 = arith.constant 0 : i32
    %c0_i32_1 = arith.constant 0 : i32
    return %c0_i32, %c0_i32_0 : i32, i32
  }
  func.func @transform_4(%arg0: i32, %arg1: i32) -> (i32, i32) {
    %c0_i32 = arith.constant 0 : i32
    %c0_i32_0 = arith.constant 0 : i32
    %c0_i32_1 = arith.constant 0 : i32
    return %c0_i32, %c0_i32_0 : i32, i32
  }
  func.func @transform_5(%arg0: i32, %arg1: i32) -> (i32, i32) {
    %c0_i32 = arith.constant 0 : i32
    %c0_i32_0 = arith.constant 0 : i32
    %c0_i32_1 = arith.constant 0 : i32
    return %c0_i32, %c0_i32_0 : i32, i32
  }
  func.func @transform_6(%arg0: i32, %arg1: i32) -> (i32, i32) {
    %c0_i32 = arith.constant 0 : i32
    %c0_i32_0 = arith.constant 0 : i32
    %c0_i32_1 = arith.constant 0 : i32
    return %c0_i32, %c0_i32_0 : i32, i32
  }
  func.func @transform_7(%arg0: i32, %arg1: i32) -> (i32, i32) {
    %c0_i32 = arith.constant 0 : i32
    %c0_i32_0 = arith.constant 0 : i32
    %c0_i32_1 = arith.constant 0 : i32
    return %c0_i32, %c0_i32_0 : i32, i32
  }
  func.func @transform_8(%arg0: i32, %arg1: i32) -> (i32, i32) {
    %c0_i32 = arith.constant 0 : i32
    %c0_i32_0 = arith.constant 0 : i32
    %c0_i32_1 = arith.constant 0 : i32
    return %c0_i32, %c0_i32_0 : i32, i32
  }
  func.func @transform_9(%arg0: i32, %arg1: i32) -> (i32, i32) {
    %c0_i32 = arith.constant 0 : i32
    %c0_i32_0 = arith.constant 0 : i32
    %c0_i32_1 = arith.constant 0 : i32
    return %c0_i32, %c0_i32_0 : i32, i32
  }
  func.func @transform_10(%arg0: i32, %arg1: i32) -> (i32, i32) {
    %c0_i32 = arith.constant 0 : i32
    %c0_i32_0 = arith.constant 0 : i32
    %c0_i32_1 = arith.constant 0 : i32
    return %c0_i32, %c0_i32_0 : i32, i32
  }
  func.func @transform_11(%arg0: i32, %arg1: i32) -> (i32, i32, i32) {
    %c0_i32 = arith.constant 0 : i32
    %c0_i32_0 = arith.constant 0 : i32
    return %arg0, %arg1, %c0_i32 : i32, i32, i32
  }
  func.func @transform_12(%arg0: i32, %arg1: i32) -> (i32, i32, i32) {
    %c0_i32 = arith.constant 0 : i32
    %c0_i32_0 = arith.constant 0 : i32
    return %arg0, %arg1, %c0_i32 : i32, i32, i32
  }
  func.func @transform_13(%arg0: i32, %arg1: i32) -> (i32, i32, i32) {
    %c0_i32 = arith.constant 0 : i32
    %c0_i32_0 = arith.constant 0 : i32
    return %arg0, %arg1, %c0_i32 : i32, i32, i32
  }
}

</mosaic_0001>

<llo_original>
// kernel: tpu_custom_call.1
$region0: #{tpu_custom_call.1}
  #allocation0 [shape = 'u32[]', space=smem, size = 0x4, offset = 0x4, fixed_abs, tag = 'smem constant byte address 0x4 - core index']
  #allocation1 [shape = 'u32[144,128]{1,0:T(1,128)}', space=vmem, size = 0x12000, scoped, tag = 'internal scratch']
  %s0 = inlined_call_operand.hbm [shape: f32[2,16,128], index: 0, kind: input, shape index: {}]
  %s1 = inlined_call_operand.hbm [shape: f32[16,128], index: 1, kind: input, shape index: {}]
  %s2 = inlined_call_operand.hbm [shape: f32[16,128], index: 2, kind: input, shape index: {}]
  %s3 = inlined_call_operand.vmem [shape: f32[1,128], index: 3, kind: input, shape index: {}]
  %s4 = inlined_call_operand.vmem [shape: f32[1,128], index: 4, kind: input, shape index: {}]
  %s5 = inlined_call_operand.hbm [shape: bf16[128,128], index: 5, kind: input, shape index: {}]
  %s6 = inlined_call_operand.vmem [shape: f32[1,128], index: 6, kind: input, shape index: {}]
  %s7 = inlined_call_operand.hbm [shape: bf16[128,128], index: 7, kind: input, shape index: {}]
  %s8 = inlined_call_operand.vmem [shape: f32[1,128], index: 8, kind: input, shape index: {}]
  %s9 = inlined_call_operand.hbm [shape: bf16[128,128], index: 9, kind: input, shape index: {}]
  %s10 = inlined_call_operand.vmem [shape: f32[1,128], index: 10, kind: input, shape index: {}]
  %s11 = inlined_call_operand.hbm [shape: bf16[2,16,128], index: 11, kind: output, shape index: {0}]
  %s12 = inlined_call_operand.hbm [shape: bf16[2,16,128], index: 12, kind: output, shape index: {1}]
  %s13 = inlined_call_operand.hbm [shape: bf16[2,16,128], index: 13, kind: output, shape index: {2}]
  %14 = xla_tuple %s11, %s12, %s13
  %s15 = sld [smem:[#allocation0]]
  $region117: #{tpu_custom_call.1} parent=0
    _
  %s17 = ssub.s32 1, %s15
  %s18 = scalar_select 0, %s17, %s15
  $region1: #{tpu_custom_call.1} parent=0
    #allocation2 [shape = 'u8[16384]{0}', space=vmem, size = 0x4000, scoped, tag = 'input window, operand 0']
    #allocation3 [shape = 's32[2]{0}', space=sflag, size = 0x8, scoped, tag = 'scoped memory for tpu_custom_call.1']
    #allocation4 [shape = 's32[2]{0}', space=sflag, size = 0x8, scoped, tag = 'scoped memory for tpu_custom_call.1']
    #allocation5 [shape = 'u8[8192]{0}', space=vmem, size = 0x2000, scoped, tag = 'input window, operand 1, single buffered']
    #allocation6 [shape = 's32[1]{0}', space=sflag, size = 0x4, scoped, tag = 'scoped memory for tpu_custom_call.1']
    #allocation7 [shape = 'u8[8192]{0}', space=vmem, size = 0x2000, scoped, tag = 'input window, operand 2, single buffered']
    #allocation8 [shape = 'u8[32768]{0}', space=vmem, size = 0x8000, scoped, tag = 'input window, operand 5, single buffered']
    #allocation9 [shape = 's32[1]{0}', space=sflag, size = 0x4, scoped, tag = 'scoped memory for tpu_custom_call.1']
    #allocation10 [shape = 'u8[32768]{0}', space=vmem, size = 0x8000, scoped, tag = 'input window, operand 7, single buffered']
    #allocation11 [shape = 'u8[32768]{0}', space=vmem, size = 0x8000, scoped, tag = 'input window, operand 9, single buffered']
    #allocation12 [shape = 's32[1]{0}', space=sflag, size = 0x4, scoped, tag = 'scoped memory for tpu_custom_call.1']
    #allocation13 [shape = 'u8[8192]{0}', space=vmem, size = 0x2000, scoped, tag = 'output window, operand 0']
    #allocation14 [shape = 'u8[8192]{0}', space=vmem, size = 0x2000, scoped, tag = 'output window, operand 1']
    #allocation15 [shape = 's32[2]{0}', space=sflag, size = 0x8, scoped, tag = 'scoped memory for tpu_custom_call.1']
    #allocation16 [shape = 'u8[8192]{0}', space=vmem, size = 0x2000, scoped, tag = 'output window, operand 2']
    %19 = vsyncpa [#allocation3], 0
    %s20 = scalar_lea.sflag [#allocation3], 1
    %21 = vsyncpa %s20, 0
    %22 = vsyncpa [#allocation6], 0
    %23 = vsyncpa [#allocation9], 0
    %24 = vsyncpa [#allocation12], 0
    %25 = vsyncpa [#allocation4], 0
    %s26 = scalar_lea.sflag [#allocation4], 1
    %27 = vsyncpa %s26, 0
    %28 = vsyncpa [#allocation15], 0
    %s29 = scalar_lea.sflag [#allocation15], 1
    %30 = vsyncpa %s29, 0
    loop: start=0, step=1, limit=4
    $region2: #{tpu_custom_call.1} parent=1 // loop_pre_header
      _
    $region3: #{tpu_custom_call.1} parent=1 // loop_header
      %s32 = sphi 0, %s36
      %p33 = scmp.ge.s32.totalorder %s32, 4
      %s39 = sphi 0, %s51
      %s40 = sphi 0, %s47
      %s41 = sphi 0, %s39
      %s42 = sphi 0, %s40
      %s43 = sphi 0, %s41
      %s44 = sphi 0, %s42
      %s56 = sphi 0, %s58
      %s59 = sphi 0, %s56
      %s60 = sphi 0, %s59
      %s76 = sphi 0, %s60
      %s82 = sphi 0, %s84
      %s85 = sphi 0, %s82
      %s86 = sphi 0, %s85
      %s102 = sphi 0, %s86
      %s108 = sphi 0, %s110
      %s111 = sphi 0, %s108
      %s112 = sphi 0, %s111
      %s128 = sphi 0, %s112
      %s132 = sphi 0, %s132
      %s134 = sphi 0, %s132
      %s135 = sphi 0, %s134
      %s149 = sphi 0, %s135
      %s153 = sphi 0, %s153
      %s155 = sphi 0, %s153
      %s156 = sphi 0, %s155
      %s170 = sphi 0, %s156
      %s174 = sphi 0, %s174
      %s176 = sphi 0, %s174
      %s177 = sphi 0, %s176
      %s191 = sphi 0, %s177
      %s195 = sphi 0, %s195
      %s197 = sphi 0, %s195
      %s198 = sphi 0, %s197
      %s212 = sphi 0, %s198
      %s216 = sphi 0, %s216
      %s218 = sphi 0, %s216
      %s219 = sphi 0, %s218
      %s233 = sphi 0, %s219
      %s237 = sphi 0, %s237
      %s239 = sphi 0, %s237
      %s240 = sphi 0, %s239
      %s254 = sphi 0, %s240
      %s258 = sphi 0, %s258
      %s260 = sphi 0, %s258
      %s261 = sphi 0, %s260
      %s275 = sphi 0, %s261
      %s279 = sphi 0, %s279
      %s281 = sphi 0, %s279
      %s282 = sphi 0, %s281
      %s296 = sphi 0, %s282
      %s304 = sphi 0, %s306
      %s307 = sphi 0, %s304
      %s308 = sphi 0, %s307
      %s324 = sphi 0, %s308
      %s332 = sphi 0, %s334
      %s335 = sphi 0, %s332
      %s336 = sphi 0, %s335
      %s352 = sphi 0, %s336
      %s360 = sphi 0, %s362
      %s363 = sphi 0, %s360
      %s364 = sphi 0, %s363
      %s380 = sphi 0, %s364
    $region4: #{tpu_custom_call.1} parent=1 // loop_header_branch
      %35 = sbr.rel (%p33) target = $region8
    $region5: #{tpu_custom_call.1} parent=1 // loop_body
      %s37 = ssub.s32 %s32, 1
      %s38 = ssub.s32 %s32, 2
      %s45 = sadd.s32 1, %s40
      %p46 = scmp.ge.s32.totalorder %s45, 1
      %s47 = scalar_select %p46, 0, %s45
      %s48 = sadd.s32 1, %s39
      %s49 = scalar_select %p46, %s48, %s39
      %p50 = scmp.ge.s32.totalorder %s49, 2
      %s51 = scalar_select %p50, 0, %s49
      %s52 = ssub.s32 %s39, %s51
      %s53 = ssub.s32 %s40, %s47
      %s54 = sor.u32 %s52, %s53
      %p55 = scmp.eq.s32.totalorder %s54, 0
      %s57 = sadd.s32 %s56, 1
      %s58 = scalar_select %p55, %s56, %s57
      %p61 = pneg %p55
      %p62 = scmp.eq.s32.totalorder %s32, 1
      %p63 = por %p61, %p62
      %p64 = scmp.ne.s32.totalorder %s56, %s59
      %p65 = scmp.eq.s32.totalorder %s32, 0
      %p66 = por %p64, %p65
      %p67 = scmp.ne.s32.totalorder %s56, %s59
      %p68 = scmp.eq.s32.totalorder %s37, 1
      %p69 = por %p67, %p68
      %p70 = scmp.ne.s32.totalorder %s59, %s60
      %p71 = scmp.eq.s32.totalorder %s37, 0
      %p72 = por %p70, %p71
      %p73 = scmp.ne.s32.totalorder %s59, %s60
      %p74 = scmp.eq.s32.totalorder %s38, 1
      %p75 = por %p73, %p74
      %p77 = scmp.ne.s32.totalorder %s60, %s76
      %p78 = scmp.eq.s32.totalorder %s38, 0
      %p79 = por %p77, %p78
      %s80 = ssub.s32 %s40, %s47
      %p81 = scmp.eq.s32.totalorder %s80, 0
      %s83 = sadd.s32 %s82, 1
      %s84 = scalar_select %p81, %s82, %s83
      %p87 = pneg %p81
      %p88 = scmp.eq.s32.totalorder %s32, 1
      %p89 = por %p87, %p88
      %p90 = scmp.ne.s32.totalorder %s82, %s85
      %p91 = scmp.eq.s32.totalorder %s32, 0
      %p92 = por %p90, %p91
      %p93 = scmp.ne.s32.totalorder %s82, %s85
      %p94 = scmp.eq.s32.totalorder %s37, 1
      %p95 = por %p93, %p94
      %p96 = scmp.ne.s32.totalorder %s85, %s86
      %p97 = scmp.eq.s32.totalorder %s37, 0
      %p98 = por %p96, %p97
      %p99 = scmp.ne.s32.totalorder %s85, %s86
      %p100 = scmp.eq.s32.totalorder %s38, 1
      %p101 = por %p99, %p100
      %p103 = scmp.ne.s32.totalorder %s86, %s102
      %p104 = scmp.eq.s32.totalorder %s38, 0
      %p105 = por %p103, %p104
      %s106 = ssub.s32 %s40, %s47
      %p107 = scmp.eq.s32.totalorder %s106, 0
      %s109 = sadd.s32 %s108, 1
      %s110 = scalar_select %p107, %s108, %s109
      %p113 = pneg %p107
      %p114 = scmp.eq.s32.totalorder %s32, 1
      %p115 = por %p113, %p114
      %p116 = scmp.ne.s32.totalorder %s108, %s111
      %p117 = scmp.eq.s32.totalorder %s32, 0
      %p118 = por %p116, %p117
      %p119 = scmp.ne.s32.totalorder %s108, %s111
      %p120 = scmp.eq.s32.totalorder %s37, 1
      %p121 = por %p119, %p120
      %p122 = scmp.ne.s32.totalorder %s111, %s112
      %p123 = scmp.eq.s32.totalorder %s37, 0
      %p124 = por %p122, %p123
      %p125 = scmp.ne.s32.totalorder %s111, %s112
      %p126 = scmp.eq.s32.totalorder %s38, 1
      %p127 = por %p125, %p126
      %p129 = scmp.ne.s32.totalorder %s112, %s128
      %p130 = scmp.eq.s32.totalorder %s38, 0
      %p131 = por %p129, %p130
      %s133 = sadd.s32 %s132, 1
      %p136 = scmp.eq.s32.totalorder %s32, 1
      %p137 = scmp.ne.s32.totalorder %s132, %s134
      %p138 = scmp.eq.s32.totalorder %s32, 0
      %p139 = por %p137, %p138
      %p140 = scmp.ne.s32.totalorder %s132, %s134
      %p141 = scmp.eq.s32.totalorder %s37, 1
      %p142 = por %p140, %p141
      %p143 = scmp.ne.s32.totalorder %s134, %s135
      %p144 = scmp.eq.s32.totalorder %s37, 0
      %p145 = por %p143, %p144
      %p146 = scmp.ne.s32.totalorder %s134, %s135
      %p147 = scmp.eq.s32.totalorder %s38, 1
      %p148 = por %p146, %p147
      %p150 = scmp.ne.s32.totalorder %s135, %s149
      %p151 = scmp.eq.s32.totalorder %s38, 0
      %p152 = por %p150, %p151
      %s154 = sadd.s32 %s153, 1
      %p157 = scmp.eq.s32.totalorder %s32, 1
      %p158 = scmp.ne.s32.totalorder %s153, %s155
      %p159 = scmp.eq.s32.totalorder %s32, 0
      %p160 = por %p158, %p159
      %p161 = scmp.ne.s32.totalorder %s153, %s155
      %p162 = scmp.eq.s32.totalorder %s37, 1
      %p163 = por %p161, %p162
      %p164 = scmp.ne.s32.totalorder %s155, %s156
      %p165 = scmp.eq.s32.totalorder %s37, 0
      %p166 = por %p164, %p165
      %p167 = scmp.ne.s32.totalorder %s155, %s156
      %p168 = scmp.eq.s32.totalorder %s38, 1
      %p169 = por %p167, %p168
      %p171 = scmp.ne.s32.totalorder %s156, %s170
      %p172 = scmp.eq.s32.totalorder %s38, 0
      %p173 = por %p171, %p172
      %s175 = sadd.s32 %s174, 1
      %p178 = scmp.eq.s32.totalorder %s32, 1
      %p179 = scmp.ne.s32.totalorder %s174, %s176
      %p180 = scmp.eq.s32.totalorder %s32, 0
      %p181 = por %p179, %p180
      %p182 = scmp.ne.s32.totalorder %s174, %s176
      %p183 = scmp.eq.s32.totalorder %s37, 1
      %p184 = por %p182, %p183
      %p185 = scmp.ne.s32.totalorder %s176, %s177
      %p186 = scmp.eq.s32.totalorder %s37, 0
      %p187 = por %p185, %p186
      %p188 = scmp.ne.s32.totalorder %s176, %s177
      %p189 = scmp.eq.s32.totalorder %s38, 1
      %p190 = por %p188, %p189
      %p192 = scmp.ne.s32.totalorder %s177, %s191
      %p193 = scmp.eq.s32.totalorder %s38, 0
      %p194 = por %p192, %p193
      %s196 = sadd.s32 %s195, 1
      %p199 = scmp.eq.s32.totalorder %s32, 1
      %p200 = scmp.ne.s32.totalorder %s195, %s197
      %p201 = scmp.eq.s32.totalorder %s32, 0
      %p202 = por %p200, %p201
      %p203 = scmp.ne.s32.totalorder %s195, %s197
      %p204 = scmp.eq.s32.totalorder %s37, 1
      %p205 = por %p203, %p204
      %p206 = scmp.ne.s32.totalorder %s197, %s198
      %p207 = scmp.eq.s32.totalorder %s37, 0
      %p208 = por %p206, %p207
      %p209 = scmp.ne.s32.totalorder %s197, %s198
      %p210 = scmp.eq.s32.totalorder %s38, 1
      %p211 = por %p209, %p210
      %p213 = scmp.ne.s32.totalorder %s198, %s212
      %p214 = scmp.eq.s32.totalorder %s38, 0
      %p215 = por %p213, %p214
      %s217 = sadd.s32 %s216, 1
      %p220 = scmp.eq.s32.totalorder %s32, 1
      %p221 = scmp.ne.s32.totalorder %s216, %s218
      %p222 = scmp.eq.s32.totalorder %s32, 0
      %p223 = por %p221, %p222
      %p224 = scmp.ne.s32.totalorder %s216, %s218
      %p225 = scmp.eq.s32.totalorder %s37, 1
      %p226 = por %p224, %p225
      %p227 = scmp.ne.s32.totalorder %s218, %s219
      %p228 = scmp.eq.s32.totalorder %s37, 0
      %p229 = por %p227, %p228
      %p230 = scmp.ne.s32.totalorder %s218, %s219
      %p231 = scmp.eq.s32.totalorder %s38, 1
      %p232 = por %p230, %p231
      %p234 = scmp.ne.s32.totalorder %s219, %s233
      %p235 = scmp.eq.s32.totalorder %s38, 0
      %p236 = por %p234, %p235
      %s238 = sadd.s32 %s237, 1
      %p241 = scmp.eq.s32.totalorder %s32, 1
      %p242 = scmp.ne.s32.totalorder %s237, %s239
      %p243 = scmp.eq.s32.totalorder %s32, 0
      %p244 = por %p242, %p243
      %p245 = scmp.ne.s32.totalorder %s237, %s239
      %p246 = scmp.eq.s32.totalorder %s37, 1
      %p247 = por %p245, %p246
      %p248 = scmp.ne.s32.totalorder %s239, %s240
      %p249 = scmp.eq.s32.totalorder %s37, 0
      %p250 = por %p248, %p249
      %p251 = scmp.ne.s32.totalorder %s239, %s240
      %p252 = scmp.eq.s32.totalorder %s38, 1
      %p253 = por %p251, %p252
      %p255 = scmp.ne.s32.totalorder %s240, %s254
      %p256 = scmp.eq.s32.totalorder %s38, 0
      %p257 = por %p255, %p256
      %s259 = sadd.s32 %s258, 1
      %p262 = scmp.eq.s32.totalorder %s32, 1
      %p263 = scmp.ne.s32.totalorder %s258, %s260
      %p264 = scmp.eq.s32.totalorder %s32, 0
      %p265 = por %p263, %p264
      %p266 = scmp.ne.s32.totalorder %s258, %s260
      %p267 = scmp.eq.s32.totalorder %s37, 1
      %p268 = por %p266, %p267
      %p269 = scmp.ne.s32.totalorder %s260, %s261
      %p270 = scmp.eq.s32.totalorder %s37, 0
      %p271 = por %p269, %p270
      %p272 = scmp.ne.s32.totalorder %s260, %s261
      %p273 = scmp.eq.s32.totalorder %s38, 1
      %p274 = por %p272, %p273
      %p276 = scmp.ne.s32.totalorder %s261, %s275
      %p277 = scmp.eq.s32.totalorder %s38, 0
      %p278 = por %p276, %p277
      %s280 = sadd.s32 %s279, 1
      %p283 = scmp.eq.s32.totalorder %s32, 1
      %p284 = scmp.ne.s32.totalorder %s279, %s281
      %p285 = scmp.eq.s32.totalorder %s32, 0
      %p286 = por %p284, %p285
      %p287 = scmp.ne.s32.totalorder %s279, %s281
      %p288 = scmp.eq.s32.totalorder %s37, 1
      %p289 = por %p287, %p288
      %p290 = scmp.ne.s32.totalorder %s281, %s282
      %p291 = scmp.eq.s32.totalorder %s37, 0
      %p292 = por %p290, %p291
      %p293 = scmp.ne.s32.totalorder %s281, %s282
      %p294 = scmp.eq.s32.totalorder %s38, 1
      %p295 = por %p293, %p294
      %p297 = scmp.ne.s32.totalorder %s282, %s296
      %p298 = scmp.eq.s32.totalorder %s38, 0
      %p299 = por %p297, %p298
      %s300 = ssub.s32 %s39, %s51
      %s301 = ssub.s32 %s40, %s47
      %s302 = sor.u32 %s300, %s301
      %p303 = scmp.eq.s32.totalorder %s302, 0
      %s305 = sadd.s32 %s304, 1
      %s306 = scalar_select %p303, %s304, %s305
      %p309 = pneg %p303
      %p310 = scmp.eq.s32.totalorder %s32, 1
      %p311 = por %p309, %p310
      %p312 = scmp.ne.s32.totalorder %s304, %s307
      %p313 = scmp.eq.s32.totalorder %s32, 0
      %p314 = por %p312, %p313
      %p315 = scmp.ne.s32.totalorder %s304, %s307
      %p316 = scmp.eq.s32.totalorder %s37, 1
      %p317 = por %p315, %p316
      %p318 = scmp.ne.s32.totalorder %s307, %s308
      %p319 = scmp.eq.s32.totalorder %s37, 0
      %p320 = por %p318, %p319
      %p321 = scmp.ne.s32.totalorder %s307, %s308
      %p322 = scmp.eq.s32.totalorder %s38, 1
      %p323 = por %p321, %p322
      %p325 = scmp.ne.s32.totalorder %s308, %s324
      %p326 = scmp.eq.s32.totalorder %s38, 0
      %p327 = por %p325, %p326
      %s328 = ssub.s32 %s39, %s51
      %s329 = ssub.s32 %s40, %s47
      %s330 = sor.u32 %s328, %s329
      %p331 = scmp.eq.s32.totalorder %s330, 0
      %s333 = sadd.s32 %s332, 1
      %s334 = scalar_select %p331, %s332, %s333
      %p337 = pneg %p331
      %p338 = scmp.eq.s32.totalorder %s32, 1
      %p339 = por %p337, %p338
      %p340 = scmp.ne.s32.totalorder %s332, %s335
      %p341 = scmp.eq.s32.totalorder %s32, 0
      %p342 = por %p340, %p341
      %p343 = scmp.ne.s32.totalorder %s332, %s335
      %p344 = scmp.eq.s32.totalorder %s37, 1
      %p345 = por %p343, %p344
      %p346 = scmp.ne.s32.totalorder %s335, %s336
      %p347 = scmp.eq.s32.totalorder %s37, 0
      %p348 = por %p346, %p347
      %p349 = scmp.ne.s32.totalorder %s335, %s336
      %p350 = scmp.eq.s32.totalorder %s38, 1
      %p351 = por %p349, %p350
      %p353 = scmp.ne.s32.totalorder %s336, %s352
      %p354 = scmp.eq.s32.totalorder %s38, 0
      %p355 = por %p353, %p354
      %s356 = ssub.s32 %s39, %s51
      %s357 = ssub.s32 %s40, %s47
      %s358 = sor.u32 %s356, %s357
      %p359 = scmp.eq.s32.totalorder %s358, 0
      %s361 = sadd.s32 %s360, 1
      %s362 = scalar_select %p359, %s360, %s361
      %p365 = pneg %p359
      %p366 = scmp.eq.s32.totalorder %s32, 1
      %p367 = por %p365, %p366
      %p368 = scmp.ne.s32.totalorder %s360, %s363
      %p369 = scmp.eq.s32.totalorder %s32, 0
      %p370 = por %p368, %p369
      %p371 = scmp.ne.s32.totalorder %s360, %s363
      %p372 = scmp.eq.s32.totalorder %s37, 1
      %p373 = por %p371, %p372
      %p374 = scmp.ne.s32.totalorder %s363, %s364
      %p375 = scmp.eq.s32.totalorder %s37, 0
      %p376 = por %p374, %p375
      %p377 = scmp.ne.s32.totalorder %s363, %s364
      %p378 = scmp.eq.s32.totalorder %s38, 1
      %p379 = por %p377, %p378
      %p381 = scmp.ne.s32.totalorder %s364, %s380
      %p382 = scmp.eq.s32.totalorder %s38, 0
      %p383 = por %p381, %p382
      %p384 = scmp.le.s32.totalorder 1, %s32
      %p385 = scmp.lt.s32.totalorder %s32, 3
      %p386 = pnand %p384, %p385
      %p387 = pneg %p386
      // Predicated region
      $region9: #{tpu_custom_call.1} parent=5 // pred_check
        _
      $region10: #{tpu_custom_call.1} parent=5 // pred_check_branch
        %389 = sbr.rel (%p386) target = $region12
      $region11: #{tpu_custom_call.1} parent=5 // pred_region
        %s390 = ssub.s32 %s32, 1
        // Predicated region
        $region13: #{tpu_custom_call.1} parent=11 // pred_check
          %p391 = pneg %p98
        $region14: #{tpu_custom_call.1} parent=11 // pred_check_branch
          %393 = sbr.rel (%p391) target = $region16
        $region15: #{tpu_custom_call.1} parent=11 // pred_region
          %s394 = smul.u32 2, %s42
          %s396 = ssub.s32 256, 256
          %397 = vsyncadd [#allocation6], %s396
          %s398 = smul.addr %s394, 128
          %s399 = scalar_lea.hbm %s1, %s398
          %s400 = sshll.u32 [#allocation5], 4
          %s401 = int_to_ptr.vmem [resolvable:$true] %s400
          %406 = dma.hbm_to_vmem [thread:$0]  %s399, 256, %s401, [#allocation6], 128, 128, 8
        $region16: #{tpu_custom_call.1} parent=11 // pred_fallthru
          _
        // Predicated region
        $region17: #{tpu_custom_call.1} parent=11 // pred_check
          %p407 = pneg %p124
        $region18: #{tpu_custom_call.1} parent=11 // pred_check_branch
          %409 = sbr.rel (%p407) target = $region20
        $region19: #{tpu_custom_call.1} parent=11 // pred_region
          %s410 = smul.u32 2, %s42
          %s412 = ssub.s32 256, 256
          %413 = vsyncadd [#allocation6], %s412
          %s414 = smul.addr %s410, 128
          %s415 = scalar_lea.hbm %s2, %s414
          %s416 = sshll.u32 [#allocation7], 4
          %s417 = int_to_ptr.vmem [resolvable:$true] %s416
          %422 = dma.hbm_to_vmem [thread:$0]  %s415, 256, %s417, [#allocation6], 128, 128, 8
        $region20: #{tpu_custom_call.1} parent=11 // pred_fallthru
          _
        // Predicated region
        $region21: #{tpu_custom_call.1} parent=11 // pred_check
          %p423 = pneg %p145
        $region22: #{tpu_custom_call.1} parent=11 // pred_check_branch
          %425 = sbr.rel (%p423) target = $region24
        $region23: #{tpu_custom_call.1} parent=11 // pred_region
          _
        $region24: #{tpu_custom_call.1} parent=11 // pred_fallthru
          _
        // Predicated region
        $region25: #{tpu_custom_call.1} parent=11 // pred_check
          %p426 = pneg %p166
        $region26: #{tpu_custom_call.1} parent=11 // pred_check_branch
          %428 = sbr.rel (%p426) target = $region28
        $region27: #{tpu_custom_call.1} parent=11 // pred_region
          _
        $region28: #{tpu_custom_call.1} parent=11 // pred_fallthru
          _
        // Predicated region
        $region29: #{tpu_custom_call.1} parent=11 // pred_check
          %p429 = pneg %p187
        $region30: #{tpu_custom_call.1} parent=11 // pred_check_branch
          %431 = sbr.rel (%p429) target = $region32
        $region31: #{tpu_custom_call.1} parent=11 // pred_region
          %s433 = ssub.s32 1024, 1024
          %434 = vsyncadd [#allocation9], %s433
          %s435 = sshll.u32 [#allocation8], 4
          %s436 = int_to_ptr.vmem [resolvable:$true] %s435
          %441 = dma.hbm_to_vmem [thread:$0]  %s5, 1024, %s436, [#allocation9], 64, 64, 4
        $region32: #{tpu_custom_call.1} parent=11 // pred_fallthru
          _
        // Predicated region
        $region33: #{tpu_custom_call.1} parent=11 // pred_check
          %p442 = pneg %p208
        $region34: #{tpu_custom_call.1} parent=11 // pred_check_branch
          %444 = sbr.rel (%p442) target = $region36
        $region35: #{tpu_custom_call.1} parent=11 // pred_region
          _
        $region36: #{tpu_custom_call.1} parent=11 // pred_fallthru
          _
        // Predicated region
        $region37: #{tpu_custom_call.1} parent=11 // pred_check
          %p445 = pneg %p229
        $region38: #{tpu_custom_call.1} parent=11 // pred_check_branch
          %447 = sbr.rel (%p445) target = $region40
        $region39: #{tpu_custom_call.1} parent=11 // pred_region
          %s449 = ssub.s32 1024, 1024
          %450 = vsyncadd [#allocation9], %s449
          %s451 = sshll.u32 [#allocation10], 4
          %s452 = int_to_ptr.vmem [resolvable:$true] %s451
          %457 = dma.hbm_to_vmem [thread:$0]  %s7, 1024, %s452, [#allocation9], 64, 64, 4
        $region40: #{tpu_custom_call.1} parent=11 // pred_fallthru
          _
        // Predicated region
        $region41: #{tpu_custom_call.1} parent=11 // pred_check
          %p458 = pneg %p250
        $region42: #{tpu_custom_call.1} parent=11 // pred_check_branch
          %460 = sbr.rel (%p458) target = $region44
        $region43: #{tpu_custom_call.1} parent=11 // pred_region
          _
        $region44: #{tpu_custom_call.1} parent=11 // pred_fallthru
          _
        // Predicated region
        $region45: #{tpu_custom_call.1} parent=11 // pred_check
          %p461 = pneg %p271
        $region46: #{tpu_custom_call.1} parent=11 // pred_check_branch
          %463 = sbr.rel (%p461) target = $region48
        $region47: #{tpu_custom_call.1} parent=11 // pred_region
          %s465 = ssub.s32 1024, 1024
          %466 = vsyncadd [#allocation12], %s465
          %s467 = sshll.u32 [#allocation11], 4
          %s468 = int_to_ptr.vmem [resolvable:$true] %s467
          %473 = dma.hbm_to_vmem [thread:$0]  %s9, 1024, %s468, [#allocation12], 64, 64, 4
        $region48: #{tpu_custom_call.1} parent=11 // pred_fallthru
          _
        // Predicated region
        $region49: #{tpu_custom_call.1} parent=11 // pred_check
          %p474 = pneg %p292
        $region50: #{tpu_custom_call.1} parent=11 // pred_check_branch
          %476 = sbr.rel (%p474) target = $region52
        $region51: #{tpu_custom_call.1} parent=11 // pred_region
          _
        $region52: #{tpu_custom_call.1} parent=11 // pred_fallthru
          _
      $region12: #{tpu_custom_call.1} parent=5 // pred_fallthru
        _
      %p477 = scmp.lt.s32.totalorder %s32, 2
      // Predicated region
      $region53: #{tpu_custom_call.1} parent=5 // pred_check
        %p478 = pneg %p477
      $region54: #{tpu_custom_call.1} parent=5 // pred_check_branch
        %480 = sbr.rel (%p478) target = $region56
      $region55: #{tpu_custom_call.1} parent=5 // pred_region
        // Predicated region
        $region57: #{tpu_custom_call.1} parent=55 // pred_check
          %p481 = pneg %p66
        $region58: #{tpu_custom_call.1} parent=55 // pred_check_branch
          %483 = sbr.rel (%p481) target = $region60
        $region59: #{tpu_custom_call.1} parent=55 // pred_region
          %s484 = sand.u32 %s56, 1
          %s485 = scalar_lea.sflag [#allocation3], %s484
          %s486 = sand.u32 %s56, 1
          %s487 = smul.addr %s486, 16
          %s488 = scalar_lea.vmem [#allocation2], %s487
          %s489 = smul.u32 2, %s40
          %s491 = ssub.s32 256, 256
          %492 = vsyncadd %s485, %s491
          %s493 = smul.addr %s39, 2
          %s494 = sadd.s32 %s489, %s493
          %s495 = smul.addr %s494, 128
          %s496 = scalar_lea.hbm %s0, %s495
          %s497 = sshll.u32 %s488, 4
          %s498 = int_to_ptr.vmem [resolvable:$true] %s497
          %503 = dma.hbm_to_vmem [thread:$0]  %s496, 256, %s498, %s485, 128, 128, 8
        $region60: #{tpu_custom_call.1} parent=55 // pred_fallthru
          _
      $region56: #{tpu_custom_call.1} parent=5 // pred_fallthru
        _
      %p504 = scmp.le.s32.totalorder 1, %s32
      %p505 = scmp.lt.s32.totalorder %s32, 3
      %p506 = pnand %p504, %p505
      %p507 = pneg %p506
      // Predicated region
      $region61: #{tpu_custom_call.1} parent=5 // pred_check
        _
      $region62: #{tpu_custom_call.1} parent=5 // pred_check_branch
        %509 = sbr.rel (%p506) target = $region64
      $region63: #{tpu_custom_call.1} parent=5 // pred_region
        %s510 = ssub.s32 %s32, 1
        %s511 = sand.u32 %s59, 1
        %s512 = scalar_lea.sflag [#allocation3], %s511
        %s513 = sand.u32 %s59, 1
        %s514 = smul.addr %s513, 16
        %s515 = scalar_lea.vmem [#allocation2], %s514
        // Predicated region
        $region65: #{tpu_custom_call.1} parent=63 // pred_check
          %p516 = pneg %p72
        $region66: #{tpu_custom_call.1} parent=63 // pred_check_branch
          %518 = sbr.rel (%p516) target = $region68
        $region67: #{tpu_custom_call.1} parent=63 // pred_region
          %519 = dma.done %s512, 256
        $region68: #{tpu_custom_call.1} parent=63 // pred_fallthru
          _
        // Predicated region
        $region69: #{tpu_custom_call.1} parent=63 // pred_check
          %p520 = pneg %p98
        $region70: #{tpu_custom_call.1} parent=63 // pred_check_branch
          %522 = sbr.rel (%p520) target = $region72
        $region71: #{tpu_custom_call.1} parent=63 // pred_region
          %523 = dma.done [#allocation6], 256
        $region72: #{tpu_custom_call.1} parent=63 // pred_fallthru
          _
        // Predicated region
        $region73: #{tpu_custom_call.1} parent=63 // pred_check
          %p524 = pneg %p124
        $region74: #{tpu_custom_call.1} parent=63 // pred_check_branch
          %526 = sbr.rel (%p524) target = $region76
        $region75: #{tpu_custom_call.1} parent=63 // pred_region
          %527 = dma.done [#allocation6], 256
        $region76: #{tpu_custom_call.1} parent=63 // pred_fallthru
          _
        // Predicated region
        $region77: #{tpu_custom_call.1} parent=63 // pred_check
          %p528 = pneg %p187
        $region78: #{tpu_custom_call.1} parent=63 // pred_check_branch
          %530 = sbr.rel (%p528) target = $region80
        $region79: #{tpu_custom_call.1} parent=63 // pred_region
          %531 = dma.done [#allocation9], 1024
        $region80: #{tpu_custom_call.1} parent=63 // pred_fallthru
          _
        // Predicated region
        $region81: #{tpu_custom_call.1} parent=63 // pred_check
          %p532 = pneg %p229
        $region82: #{tpu_custom_call.1} parent=63 // pred_check_branch
          %534 = sbr.rel (%p532) target = $region84
        $region83: #{tpu_custom_call.1} parent=63 // pred_region
          %535 = dma.done [#allocation9], 1024
        $region84: #{tpu_custom_call.1} parent=63 // pred_fallthru
          _
        // Predicated region
        $region85: #{tpu_custom_call.1} parent=63 // pred_check
          %p536 = pneg %p271
        $region86: #{tpu_custom_call.1} parent=63 // pred_check_branch
          %538 = sbr.rel (%p536) target = $region88
        $region87: #{tpu_custom_call.1} parent=63 // pred_region
          %539 = dma.done [#allocation12], 1024
        $region88: #{tpu_custom_call.1} parent=63 // pred_fallthru
          _
        %s540 = sand.u32 %s59, 1
        %s541 = scalar_lea.sflag [#allocation3], %s540
        %s542 = sand.u32 %s59, 1
        %s543 = smul.addr %s542, 16
        %s544 = scalar_lea.vmem [#allocation2], %s543
        %p545 = pneg %p72
        %p546 = pneg %p69
        %p547 = pneg %p98
        %p548 = pneg %p95
        %p549 = pneg %p124
        %p550 = pneg %p121
        %p551 = pneg %p145
        %p552 = pneg %p142
        %p553 = pneg %p166
        %p554 = pneg %p163
        %p555 = pneg %p187
        %p556 = pneg %p184
        %p557 = pneg %p208
        %p558 = pneg %p205
        %p559 = pneg %p229
        %p560 = pneg %p226
        %p561 = pneg %p250
        %p562 = pneg %p247
        %p563 = pneg %p271
        %p564 = pneg %p268
        %p565 = pneg %p292
        %p566 = pneg %p289
        %p567 = pneg %p320
        %p568 = pneg %p317
        %s569 = sand.u32 %s307, 1
        %s570 = scalar_lea.sflag [#allocation4], %s569
        %s571 = sand.u32 %s307, 1
        %s572 = smul.addr %s571, 8
        %s573 = scalar_lea.vmem [#allocation13], %s572
        %p574 = pneg %p348
        %p575 = pneg %p345
        %s576 = sand.u32 %s37, 1
        %s577 = scalar_lea.sflag [#allocation15], %s576
        %s578 = sand.u32 %s335, 1
        %s579 = smul.addr %s578, 8
        %s580 = scalar_lea.vmem [#allocation14], %s579
        %p581 = pneg %p376
        %p582 = pneg %p373
        %s583 = sand.u32 %s37, 1
        %s584 = scalar_lea.sflag [#allocation15], %s583
        %s585 = sand.u32 %s363, 1
        %s586 = smul.addr %s585, 8
        %s587 = scalar_lea.vmem [#allocation16], %s586
        %s588 = smul.u32 2, %s42
        %s589 = smul.u32 2, %s42
        %s590 = smul.u32 2, %s42
        %s591 = smul.u32 2, %s42
        %s592 = smul.u32 2, %s42
        %s593 = smul.u32 2, %s42
        %v595 = vld [vmem:[%s515] sm:$0xff]
        %v596 = vld [vmem:[%s515 + $0x8] sm:$0xff]
        %597 = vadd.xlane.f32.xlu0 %v595
        %v598 = vpop.xlane.xlu0 %597
        %599 = vadd.xlane.f32.xlu0 %v596
        %v600 = vpop.xlane.xlu0 %599
        %v601 = vrcp.pop 128.0
        %v602 = vmul.f32 %v598, %v601
        %v603 = vmul.f32 %v600, %v601
        %v604 = vsub.f32 %v595, %v602
        %v605 = vsub.f32 %v596, %v603
        %v606 = vmul.f32 %v604, %v604
        %v607 = vmul.f32 %v605, %v605
        %608 = vadd.xlane.f32.xlu0 %v606
        %v609 = vpop.xlane.xlu0 %608
        %610 = vadd.xlane.f32.xlu0 %v607
        %v611 = vpop.xlane.xlu0 %610
        %v612 = vmul.f32 %v609, %v601
        %v613 = vmul.f32 %v611, %v601
        %v614 = vadd.f32 %v612, 1e-05
        %v615 = vadd.f32 %v613, 1e-05
        %v616 = vrsqrt.pop %v614
        %v617 = vrsqrt.pop %v615
        %v618 = vmul.f32 %v604, %v616
        %v619 = vmul.f32 %v605, %v617
        %v620 = vld [vmem:[%s3] sm:$0x1]
        %v622 = vlaneseq
        %v623 = vshrl.u32 %v622, 7
        %v624 = vsub.s32 0, %v623
        %v625 = vrot.slane %v620, %v624
        %v627 = vmul.f32 %v618, %v625
        %v628 = vmul.f32 %v619, %v625
        %v629 = vld [vmem:[%s4] sm:$0x1]
        %v631 = vlaneseq
        %v632 = vshrl.u32 %v631, 7
        %v633 = vsub.s32 0, %v632
        %v634 = vrot.slane %v629, %v633
        %v636 = vadd.f32 %v627, %v634
        %v637 = vadd.f32 %v628, %v634
        %v638 = vpack.c.bf16 %v637, %v636
        %v639 = vld [vmem:[#allocation8] sm:$0xf]
        %v640 = vld [vmem:[#allocation8 + $0x4] sm:$0xf]
        %v641 = vld [vmem:[#allocation8 + $0x8] sm:$0xf]
        %v642 = vld [vmem:[#allocation8 + $0xc] sm:$0xf]
        %v643 = vld [vmem:[#allocation8 + $0x10] sm:$0xf]
        %v644 = vld [vmem:[#allocation8 + $0x14] sm:$0xf]
        %v645 = vld [vmem:[#allocation8 + $0x18] sm:$0xf]
        %v646 = vld [vmem:[#allocation8 + $0x1c] sm:$0xf]
        %v647 = vld [vmem:[#allocation8 + $0x20] sm:$0xf]
        %v648 = vld [vmem:[#allocation8 + $0x24] sm:$0xf]
        %v649 = vld [vmem:[#allocation8 + $0x28] sm:$0xf]
        %v650 = vld [vmem:[#allocation8 + $0x2c] sm:$0xf]
        %v651 = vld [vmem:[#allocation8 + $0x30] sm:$0xf]
        %v652 = vld [vmem:[#allocation8 + $0x34] sm:$0xf]
        %v653 = vld [vmem:[#allocation8 + $0x38] sm:$0xf]
        %v654 = vld [vmem:[#allocation8 + $0x3c] sm:$0xf]
        %v655 = vld [vmem:[%s6] sm:$0x1]
        %v657 = vlaneseq
        %v658 = vshrl.u32 %v657, 7
        %v659 = vsub.s32 0, %v658
        %v660 = vrot.slane %v655, %v659
        %v678 = vunpack.c.l.b16 %v639
        %v679 = vunpack.c.l.b16 %v640
        %v680 = vunpack.c.l.b16 %v641
        %v681 = vunpack.c.l.b16 %v642
        %v682 = vunpack.c.l.b16 %v643
        %v683 = vunpack.c.l.b16 %v644
        %v684 = vunpack.c.l.b16 %v645
        %v685 = vunpack.c.l.b16 %v646
        %v686 = vunpack.c.l.b16 %v647
        %v687 = vunpack.c.l.b16 %v648
        %v688 = vunpack.c.l.b16 %v649
        %v689 = vunpack.c.l.b16 %v650
        %v690 = vunpack.c.l.b16 %v651
        %v691 = vunpack.c.l.b16 %v652
        %v692 = vunpack.c.l.b16 %v653
        %v693 = vunpack.c.l.b16 %v654
        %v694 = vpack.c.b16 %v679, %v678
        %v695 = vpack.c.b16 %v681, %v680
        %v696 = vpack.c.b16 %v683, %v682
        %v697 = vpack.c.b16 %v685, %v684
        %v698 = vpack.c.b16 %v687, %v686
        %v699 = vpack.c.b16 %v689, %v688
        %v700 = vpack.c.b16 %v691, %v690
        %v701 = vpack.c.b16 %v693, %v692
        %710 = vmatprep.subr.bf16.mxu0 0
        %711 = vmatpush1.bf16.msra.mxu0 %v694
        %712 = vmatprep.subr.bf16.mxu0 0
        %713 = vmatpush1.bf16.msra.mxu0 %v695
        %714 = vmatprep.subr.bf16.mxu0 0
        %715 = vmatpush1.bf16.msra.mxu0 %v696
        %716 = vmatprep.subr.bf16.mxu0 0
        %717 = vmatpush1.bf16.msra.mxu0 %v697
        %718 = vmatprep.subr.bf16.mxu0 0
        %719 = vmatpush1.bf16.msra.mxu0 %v698
        %720 = vmatprep.subr.bf16.mxu0 0
        %721 = vmatpush1.bf16.msra.mxu0 %v699
        %722 = vmatprep.subr.bf16.mxu0 0
        %723 = vmatpush1.bf16.msra.mxu0 %v700
        %724 = vmatprep.subr.bf16.mxu0 0
        %725 = vmatpush1.bf16.msra.mxu0 %v701
        %726 = vmatprep.subr.bf16.mxu0 0
        %727 = vmatpush1.bf16.msra.mxu0 0
        %728 = vmatprep.subr.bf16.mxu0 0
        %729 = vmatpush1.bf16.msra.mxu0 0
        %730 = vmatprep.subr.bf16.mxu0 0
        %731 = vmatpush1.bf16.msra.mxu0 0
        %732 = vmatprep.subr.bf16.mxu0 0
        %733 = vmatpush1.bf16.msra.mxu0 0
        %734 = vmatprep.subr.bf16.mxu0 0
        %735 = vmatpush1.bf16.msra.mxu0 0
        %736 = vmatprep.subr.bf16.mxu0 0
        %737 = vmatpush1.bf16.msra.mxu0 0
        %738 = vmatprep.subr.bf16.mxu0 0
        %739 = vmatpush1.bf16.msra.mxu0 0
        %740 = vmatprep.subr.bf16.mxu0 0
        %741 = vmatpush1.bf16.msra.mxu0 0
        %742 = vmatprep.mubr.bf16.mxu0 0
        %743 = vmatmul.mubr.bf16.gmra.mrb[0].mxu0 %v638
        %v744 = vpop.f32.mrb[0].mxu0
        %v745 = vadd.f32 %v660, %v744
        %v746 = vpop.f32.mrb[0].mxu0
        %v747 = vpop.f32.mrb[0].mxu0
        %v748 = vadd.f32 %v660, %v747
        %v749 = vpop.f32.mrb[0].mxu0
        %750 = vdwg.mxu0
        %v751 = vld [vmem:[#allocation10] sm:$0xf]
        %v752 = vld [vmem:[#allocation10 + $0x4] sm:$0xf]
        %v753 = vld [vmem:[#allocation10 + $0x8] sm:$0xf]
        %v754 = vld [vmem:[#allocation10 + $0xc] sm:$0xf]
        %v755 = vld [vmem:[#allocation10 + $0x10] sm:$0xf]
        %v756 = vld [vmem:[#allocation10 + $0x14] sm:$0xf]
        %v757 = vld [vmem:[#allocation10 + $0x18] sm:$0xf]
        %v758 = vld [vmem:[#allocation10 + $0x1c] sm:$0xf]
        %v759 = vld [vmem:[#allocation10 + $0x20] sm:$0xf]
        %v760 = vld [vmem:[#allocation10 + $0x24] sm:$0xf]
        %v761 = vld [vmem:[#allocation10 + $0x28] sm:$0xf]
        %v762 = vld [vmem:[#allocation10 + $0x2c] sm:$0xf]
        %v763 = vld [vmem:[#allocation10 + $0x30] sm:$0xf]
        %v764 = vld [vmem:[#allocation10 + $0x34] sm:$0xf]
        %v765 = vld [vmem:[#allocation10 + $0x38] sm:$0xf]
        %v766 = vld [vmem:[#allocation10 + $0x3c] sm:$0xf]
        %v767 = vld [vmem:[%s8] sm:$0x1]
        %v769 = vlaneseq
        %v770 = vshrl.u32 %v769, 7
        %v771 = vsub.s32 0, %v770
        %v772 = vrot.slane %v767, %v771
        %v790 = vunpack.c.l.b16 %v751
        %v791 = vunpack.c.l.b16 %v752
        %v792 = vunpack.c.l.b16 %v753
        %v793 = vunpack.c.l.b16 %v754
        %v794 = vunpack.c.l.b16 %v755
        %v795 = vunpack.c.l.b16 %v756
        %v796 = vunpack.c.l.b16 %v757
        %v797 = vunpack.c.l.b16 %v758
        %v798 = vunpack.c.l.b16 %v759
        %v799 = vunpack.c.l.b16 %v760
        %v800 = vunpack.c.l.b16 %v761
        %v801 = vunpack.c.l.b16 %v762
        %v802 = vunpack.c.l.b16 %v763
        %v803 = vunpack.c.l.b16 %v764
        %v804 = vunpack.c.l.b16 %v765
        %v805 = vunpack.c.l.b16 %v766
        %v806 = vpack.c.b16 %v791, %v790
        %v807 = vpack.c.b16 %v793, %v792
        %v808 = vpack.c.b16 %v795, %v794
        %v809 = vpack.c.b16 %v797, %v796
        %v810 = vpack.c.b16 %v799, %v798
        %v811 = vpack.c.b16 %v801, %v800
        %v812 = vpack.c.b16 %v803, %v802
        %v813 = vpack.c.b16 %v805, %v804
        %822 = vmatprep.subr.bf16.mxu0 0
        %823 = vmatpush1.bf16.msra.mxu0 %v806
        %824 = vmatprep.subr.bf16.mxu0 0
        %825 = vmatpush1.bf16.msra.mxu0 %v807
        %826 = vmatprep.subr.bf16.mxu0 0
        %827 = vmatpush1.bf16.msra.mxu0 %v808
        %828 = vmatprep.subr.bf16.mxu0 0
        %829 = vmatpush1.bf16.msra.mxu0 %v809
        %830 = vmatprep.subr.bf16.mxu0 0
        %831 = vmatpush1.bf16.msra.mxu0 %v810
        %832 = vmatprep.subr.bf16.mxu0 0
        %833 = vmatpush1.bf16.msra.mxu0 %v811
        %834 = vmatprep.subr.bf16.mxu0 0
        %835 = vmatpush1.bf16.msra.mxu0 %v812
        %836 = vmatprep.subr.bf16.mxu0 0
        %837 = vmatpush1.bf16.msra.mxu0 %v813
        %838 = vmatprep.subr.bf16.mxu0 0
        %839 = vmatpush1.bf16.msra.mxu0 0
        %840 = vmatprep.subr.bf16.mxu0 0
        %841 = vmatpush1.bf16.msra.mxu0 0
        %842 = vmatprep.subr.bf16.mxu0 0
        %843 = vmatpush1.bf16.msra.mxu0 0
        %844 = vmatprep.subr.bf16.mxu0 0
        %845 = vmatpush1.bf16.msra.mxu0 0
        %846 = vmatprep.subr.bf16.mxu0 0
        %847 = vmatpush1.bf16.msra.mxu0 0
        %848 = vmatprep.subr.bf16.mxu0 0
        %849 = vmatpush1.bf16.msra.mxu0 0
        %850 = vmatprep.subr.bf16.mxu0 0
        %851 = vmatpush1.bf16.msra.mxu0 0
        %852 = vmatprep.subr.bf16.mxu0 0
        %853 = vmatpush1.bf16.msra.mxu0 0
        %854 = vmatprep.mubr.bf16.mxu0 0
        %855 = vmatmul.mubr.bf16.gmra.mrb[0].mxu0 %v638
        %v856 = vpop.f32.mrb[0].mxu0
        %v857 = vadd.f32 %v772, %v856
        %v858 = vpop.f32.mrb[0].mxu0
        %v859 = vpop.f32.mrb[0].mxu0
        %v860 = vadd.f32 %v772, %v859
        %v861 = vpop.f32.mrb[0].mxu0
        %862 = vdwg.mxu0
        %v863 = vld [vmem:[#allocation11] sm:$0xf]
        %v864 = vld [vmem:[#allocation11 + $0x4] sm:$0xf]
        %v865 = vld [vmem:[#allocation11 + $0x8] sm:$0xf]
        %v866 = vld [vmem:[#allocation11 + $0xc] sm:$0xf]
        %v867 = vld [vmem:[#allocation11 + $0x10] sm:$0xf]
        %v868 = vld [vmem:[#allocation11 + $0x14] sm:$0xf]
        %v869 = vld [vmem:[#allocation11 + $0x18] sm:$0xf]
        %v870 = vld [vmem:[#allocation11 + $0x1c] sm:$0xf]
        %v871 = vld [vmem:[#allocation11 + $0x20] sm:$0xf]
        %v872 = vld [vmem:[#allocation11 + $0x24] sm:$0xf]
        %v873 = vld [vmem:[#allocation11 + $0x28] sm:$0xf]
        %v874 = vld [vmem:[#allocation11 + $0x2c] sm:$0xf]
        %v875 = vld [vmem:[#allocation11 + $0x30] sm:$0xf]
        %v876 = vld [vmem:[#allocation11 + $0x34] sm:$0xf]
        %v877 = vld [vmem:[#allocation11 + $0x38] sm:$0xf]
        %v878 = vld [vmem:[#allocation11 + $0x3c] sm:$0xf]
        %v879 = vld [vmem:[%s10] sm:$0x1]
        %v881 = vlaneseq
        %v882 = vshrl.u32 %v881, 7
        %v883 = vsub.s32 0, %v882
        %v884 = vrot.slane %v879, %v883
        %v902 = vunpack.c.l.b16 %v863
        %v903 = vunpack.c.l.b16 %v864
        %v904 = vunpack.c.l.b16 %v865
        %v905 = vunpack.c.l.b16 %v866
        %v906 = vunpack.c.l.b16 %v867
        %v907 = vunpack.c.l.b16 %v868
        %v908 = vunpack.c.l.b16 %v869
        %v909 = vunpack.c.l.b16 %v870
        %v910 = vunpack.c.l.b16 %v871
        %v911 = vunpack.c.l.b16 %v872
        %v912 = vunpack.c.l.b16 %v873
        %v913 = vunpack.c.l.b16 %v874
        %v914 = vunpack.c.l.b16 %v875
        %v915 = vunpack.c.l.b16 %v876
        %v916 = vunpack.c.l.b16 %v877
        %v917 = vunpack.c.l.b16 %v878
        %v918 = vpack.c.b16 %v903, %v902
        %v919 = vpack.c.b16 %v905, %v904
        %v920 = vpack.c.b16 %v907, %v906
        %v921 = vpack.c.b16 %v909, %v908
        %v922 = vpack.c.b16 %v911, %v910
        %v923 = vpack.c.b16 %v913, %v912
        %v924 = vpack.c.b16 %v915, %v914
        %v925 = vpack.c.b16 %v917, %v916
        %934 = vmatprep.subr.bf16.mxu0 0
        %935 = vmatpush1.bf16.msra.mxu0 %v918
        %936 = vmatprep.subr.bf16.mxu0 0
        %937 = vmatpush1.bf16.msra.mxu0 %v919
        %938 = vmatprep.subr.bf16.mxu0 0
        %939 = vmatpush1.bf16.msra.mxu0 %v920
        %940 = vmatprep.subr.bf16.mxu0 0
        %941 = vmatpush1.bf16.msra.mxu0 %v921
        %942 = vmatprep.subr.bf16.mxu0 0
        %943 = vmatpush1.bf16.msra.mxu0 %v922
        %944 = vmatprep.subr.bf16.mxu0 0
        %945 = vmatpush1.bf16.msra.mxu0 %v923
        %946 = vmatprep.subr.bf16.mxu0 0
        %947 = vmatpush1.bf16.msra.mxu0 %v924
        %948 = vmatprep.subr.bf16.mxu0 0
        %949 = vmatpush1.bf16.msra.mxu0 %v925
        %950 = vmatprep.subr.bf16.mxu0 0
        %951 = vmatpush1.bf16.msra.mxu0 0
        %952 = vmatprep.subr.bf16.mxu0 0
        %953 = vmatpush1.bf16.msra.mxu0 0
        %954 = vmatprep.subr.bf16.mxu0 0
        %955 = vmatpush1.bf16.msra.mxu0 0
        %956 = vmatprep.subr.bf16.mxu0 0
        %957 = vmatpush1.bf16.msra.mxu0 0
        %958 = vmatprep.subr.bf16.mxu0 0
        %959 = vmatpush1.bf16.msra.mxu0 0
        %960 = vmatprep.subr.bf16.mxu0 0
        %961 = vmatpush1.bf16.msra.mxu0 0
        %962 = vmatprep.subr.bf16.mxu0 0
        %963 = vmatpush1.bf16.msra.mxu0 0
        %964 = vmatprep.subr.bf16.mxu0 0
        %965 = vmatpush1.bf16.msra.mxu0 0
        %966 = vmatprep.mubr.bf16.mxu0 0
        %967 = vmatmul.mubr.bf16.gmra.mrb[0].mxu0 %v638
        %v968 = vpop.f32.mrb[0].mxu0
        %v969 = vadd.f32 %v884, %v968
        %v970 = vpop.f32.mrb[0].mxu0
        %v971 = vpop.f32.mrb[0].mxu0
        %v972 = vadd.f32 %v884, %v971
        %v973 = vpop.f32.mrb[0].mxu0
        %974 = vdwg.mxu0
        %v975 = vld [vmem:[#allocation5] sm:$0xff]
        %v976 = vld [vmem:[#allocation5 + $0x8] sm:$0xff]
        %v977 = vld [vmem:[#allocation7] sm:$0xff]
        %v978 = vld [vmem:[#allocation7 + $0x8] sm:$0xff]
        %v979 = vsub.f32 0.0, %v745
        %v980 = vsub.f32 0.0, %v748
        %983 = vrot.lane.b32.xlu0 %v979, 112
        %v984 = vpop.permute.xlu0 %983
        %985 = vrot.lane.b32.xlu0 %v980, 112
        %v986 = vpop.permute.xlu0 %985
        %991 = vrot.lane.b32.xlu0 %v745, 16
        %v992 = vpop.permute.xlu0 %991
        %993 = vrot.lane.b32.xlu0 %v748, 16
        %v994 = vpop.permute.xlu0 %993
        %vm997 = vcmask 130048
        %v998 = vsel %vm997, %v984, %v992
        %v999 = vsel %vm997, %v986, %v994
        %vm1000 = vcmask 261120
        %v1001 = vsel %vm1000, %v998, %v984
        %v1002 = vsel %vm1000, %v999, %v986
        %vm1003 = vcmask 392192
        %v1004 = vsel %vm1003, %v1001, %v992
        %v1005 = vsel %vm1003, %v1002, %v994
        %vm1006 = vcmask 523264
        %v1007 = vsel %vm1006, %v1004, %v984
        %v1008 = vsel %vm1006, %v1005, %v986
        %vm1009 = vcmask 654336
        %v1010 = vsel %vm1009, %v1007, %v992
        %v1011 = vsel %vm1009, %v1008, %v994
        %vm1012 = vcmask 785408
        %v1013 = vsel %vm1012, %v1010, %v984
        %v1014 = vsel %vm1012, %v1011, %v986
        %vm1015 = vcmask 916480
        %v1016 = vsel %vm1015, %v1013, %v992
        %v1017 = vsel %vm1015, %v1014, %v994
        %v1018 = vmul.f32 %v745, %v975
        %v1019 = vmul.f32 %v748, %v976
        %v1020 = vmul.f32 %v1016, %v977
        %v1021 = vmul.f32 %v1017, %v978
        %v1022 = vadd.f32 %v1018, %v1020
        %v1023 = vadd.f32 %v1019, %v1021
        %v1024 = vpack.c.bf16 %v1023, %v1022
        %v1026 = vunpack.c.l.b16 %v1024
        %v1027 = vunpack.c.h.b16 %v1024
        %v1028 = vpack.c.b16 %v1026, %v1026
        %v1029 = vpack.c.b16 %v1027, %v1027
        %1032 = vst [vmem:[%s573] sm:$0xf] %v1028
        %1033 = vst [vmem:[%s573 + $0x4] sm:$0xf] %v1029
        %v1034 = vsub.f32 0.0, %v857
        %v1035 = vsub.f32 0.0, %v860
        %1038 = vrot.lane.b32.xlu0 %v1034, 112
        %v1039 = vpop.permute.xlu0 %1038
        %1040 = vrot.lane.b32.xlu0 %v1035, 112
        %v1041 = vpop.permute.xlu0 %1040
        %1046 = vrot.lane.b32.xlu0 %v857, 16
        %v1047 = vpop.permute.xlu0 %1046
        %1048 = vrot.lane.b32.xlu0 %v860, 16
        %v1049 = vpop.permute.xlu0 %1048
        %v1052 = vsel %vm997, %v1039, %v1047
        %v1053 = vsel %vm997, %v1041, %v1049
        %v1054 = vsel %vm1000, %v1052, %v1039
        %v1055 = vsel %vm1000, %v1053, %v1041
        %v1056 = vsel %vm1003, %v1054, %v1047
        %v1057 = vsel %vm1003, %v1055, %v1049
        %v1058 = vsel %vm1006, %v1056, %v1039
        %v1059 = vsel %vm1006, %v1057, %v1041
        %v1060 = vsel %vm1009, %v1058, %v1047
        %v1061 = vsel %vm1009, %v1059, %v1049
        %v1062 = vsel %vm1012, %v1060, %v1039
        %v1063 = vsel %vm1012, %v1061, %v1041
        %v1064 = vsel %vm1015, %v1062, %v1047
        %v1065 = vsel %vm1015, %v1063, %v1049
        %v1066 = vmul.f32 %v857, %v975
        %v1067 = vmul.f32 %v860, %v976
        %v1068 = vmul.f32 %v1064, %v977
        %v1069 = vmul.f32 %v1065, %v978
        %v1070 = vadd.f32 %v1066, %v1068
        %v1071 = vadd.f32 %v1067, %v1069
        %v1072 = vpack.c.bf16 %v1071, %v1070
        %v1074 = vunpack.c.l.b16 %v1072
        %v1075 = vunpack.c.h.b16 %v1072
        %v1076 = vpack.c.b16 %v1074, %v1074
        %v1077 = vpack.c.b16 %v1075, %v1075
        %1080 = vst [vmem:[%s580] sm:$0xf] %v1076
        %1081 = vst [vmem:[%s580 + $0x4] sm:$0xf] %v1077
        %v1082 = vpack.c.bf16 %v972, %v969
        %v1084 = vunpack.c.l.b16 %v1082
        %v1085 = vunpack.c.h.b16 %v1082
        %v1086 = vpack.c.b16 %v1084, %v1084
        %v1087 = vpack.c.b16 %v1085, %v1085
        %1090 = vst [vmem:[%s587] sm:$0xf] %v1086
        %1091 = vst [vmem:[%s587 + $0x4] sm:$0xf] %v1087
        %s1092 = sand.u32 %s307, 1
        %s1093 = scalar_lea.sflag [#allocation4], %s1092
        %s1094 = sand.u32 %s307, 1
        %s1095 = smul.addr %s1094, 8
        %s1096 = scalar_lea.vmem [#allocation13], %s1095
        %s1097 = sand.u32 %s37, 1
        %s1098 = scalar_lea.sflag [#allocation15], %s1097
        %s1099 = sand.u32 %s335, 1
        %s1100 = smul.addr %s1099, 8
        %s1101 = scalar_lea.vmem [#allocation14], %s1100
        %s1102 = sand.u32 %s37, 1
        %s1103 = scalar_lea.sflag [#allocation15], %s1102
        %s1104 = sand.u32 %s363, 1
        %s1105 = smul.addr %s1104, 8
        %s1106 = scalar_lea.vmem [#allocation16], %s1105
        // Predicated region
        $region89: #{tpu_custom_call.1} parent=63 // pred_check
          %p1107 = pneg %p317
        $region90: #{tpu_custom_call.1} parent=63 // pred_check_branch
          %1109 = sbr.rel (%p1107) target = $region92
        $region91: #{tpu_custom_call.1} parent=63 // pred_region
          %s1110 = smul.u32 2, %s42
          %s1112 = ssub.s32 128, 128
          %1113 = vsyncadd %s1093, %s1112
          %s1114 = smul.addr %s41, 2
          %s1115 = sadd.s32 %s1110, %s1114
          %s1116 = smul.addr %s1115, 64
          %s1117 = scalar_lea.hbm %s11, %s1116
          %s1118 = sshll.u32 %s1096, 4
          %s1119 = int_to_ptr.vmem [resolvable:$true] %s1118
          %1124 = dma.vmem_to_hbm [thread:$0]  %s1119, 128, %s1117, %s1093, 64, 64, 4
        $region92: #{tpu_custom_call.1} parent=63 // pred_fallthru
          _
        // Predicated region
        $region93: #{tpu_custom_call.1} parent=63 // pred_check
          %p1125 = pneg %p345
        $region94: #{tpu_custom_call.1} parent=63 // pred_check_branch
          %1127 = sbr.rel (%p1125) target = $region96
        $region95: #{tpu_custom_call.1} parent=63 // pred_region
          %s1128 = smul.u32 2, %s42
          %s1130 = ssub.s32 128, 128
          %1131 = vsyncadd %s1098, %s1130
          %s1132 = smul.addr %s41, 2
          %s1133 = sadd.s32 %s1128, %s1132
          %s1134 = smul.addr %s1133, 64
          %s1135 = scalar_lea.hbm %s12, %s1134
          %s1136 = sshll.u32 %s1101, 4
          %s1137 = int_to_ptr.vmem [resolvable:$true] %s1136
          %1142 = dma.vmem_to_hbm [thread:$0]  %s1137, 128, %s1135, %s1098, 64, 64, 4
        $region96: #{tpu_custom_call.1} parent=63 // pred_fallthru
          _
        // Predicated region
        $region97: #{tpu_custom_call.1} parent=63 // pred_check
          %p1143 = pneg %p373
        $region98: #{tpu_custom_call.1} parent=63 // pred_check_branch
          %1145 = sbr.rel (%p1143) target = $region100
        $region99: #{tpu_custom_call.1} parent=63 // pred_region
          %s1146 = smul.u32 2, %s42
          %s1148 = ssub.s32 128, 128
          %1149 = vsyncadd %s1103, %s1148
          %s1150 = smul.addr %s41, 2
          %s1151 = sadd.s32 %s1146, %s1150
          %s1152 = smul.addr %s1151, 64
          %s1153 = scalar_lea.hbm %s13, %s1152
          %s1154 = sshll.u32 %s1106, 4
          %s1155 = int_to_ptr.vmem [resolvable:$true] %s1154
          %1160 = dma.vmem_to_hbm [thread:$0]  %s1155, 128, %s1153, %s1103, 64, 64, 4
        $region100: #{tpu_custom_call.1} parent=63 // pred_fallthru
          _
      $region64: #{tpu_custom_call.1} parent=5 // pred_fallthru
        _
      %p1161 = scmp.le.s32.totalorder 2, %s32
      // Predicated region
      $region101: #{tpu_custom_call.1} parent=5 // pred_check
        %p1162 = pneg %p1161
      $region102: #{tpu_custom_call.1} parent=5 // pred_check_branch
        %1164 = sbr.rel (%p1162) target = $region104
      $region103: #{tpu_custom_call.1} parent=5 // pred_region
        %s1165 = ssub.s32 %s32, 2
        // Predicated region
        $region105: #{tpu_custom_call.1} parent=103 // pred_check
          %p1166 = pneg %p323
        $region106: #{tpu_custom_call.1} parent=103 // pred_check_branch
          %1168 = sbr.rel (%p1166) target = $region108
        $region107: #{tpu_custom_call.1} parent=103 // pred_region
          %s1169 = sand.u32 %s308, 1
          %s1170 = scalar_lea.sflag [#allocation4], %s1169
          %s1171 = sand.u32 %s308, 1
          %s1172 = smul.addr %s1171, 8
          %s1173 = scalar_lea.vmem [#allocation13], %s1172
          %1174 = dma.done %s1170, 128
        $region108: #{tpu_custom_call.1} parent=103 // pred_fallthru
          _
        // Predicated region
        $region109: #{tpu_custom_call.1} parent=103 // pred_check
          %p1175 = pneg %p351
        $region110: #{tpu_custom_call.1} parent=103 // pred_check_branch
          %1177 = sbr.rel (%p1175) target = $region112
        $region111: #{tpu_custom_call.1} parent=103 // pred_region
          %s1178 = sand.u32 %s38, 1
          %s1179 = scalar_lea.sflag [#allocation15], %s1178
          %s1180 = sand.u32 %s336, 1
          %s1181 = smul.addr %s1180, 8
          %s1182 = scalar_lea.vmem [#allocation14], %s1181
          %1183 = dma.done %s1179, 128
        $region112: #{tpu_custom_call.1} parent=103 // pred_fallthru
          _
        // Predicated region
        $region113: #{tpu_custom_call.1} parent=103 // pred_check
          %p1184 = pneg %p379
        $region114: #{tpu_custom_call.1} parent=103 // pred_check_branch
          %1186 = sbr.rel (%p1184) target = $region116
        $region115: #{tpu_custom_call.1} parent=103 // pred_region
          %s1187 = sand.u32 %s38, 1
          %s1188 = scalar_lea.sflag [#allocation15], %s1187
          %s1189 = sand.u32 %s364, 1
          %s1190 = smul.addr %s1189, 8
          %s1191 = scalar_lea.vmem [#allocation16], %s1190
          %1192 = dma.done %s1188, 128
        $region116: #{tpu_custom_call.1} parent=103 // pred_fallthru
          _
      $region104: #{tpu_custom_call.1} parent=5 // pred_fallthru
        _
    $region6: #{tpu_custom_call.1} parent=1 // loop_footer
      %s36 = sadd.s32 1, %s32
    $region7: #{tpu_custom_call.1} parent=1 // loop_footer_branch
      %31 = sbr.rel target = $region3
    $region8: #{tpu_custom_call.1} parent=1 // loop_exit
      _
    %1193 = vsyncpa [#allocation3], 1
    %s1194 = scalar_lea.sflag [#allocation3], 1
    %1195 = vsyncpa %s1194, 1
    %1196 = vsyncpa [#allocation6], 1
    %1197 = vsyncpa [#allocation9], 1
    %1198 = vsyncpa [#allocation12], 1
    %1199 = vsyncpa [#allocation4], 1
    %s1200 = scalar_lea.sflag [#allocation4], 1
    %1201 = vsyncpa %s1200, 1
    %1202 = vsyncpa [#allocation15], 1
    %s1203 = scalar_lea.sflag [#allocation15], 1
    %1204 = vsyncpa %s1203, 1

// kernel: tpu_custom_call.1
$region0: #{tpu_custom_call.1}
  #allocation0 [shape = 'u32[]', space=smem, size = 0x4, offset = 0x4, fixed_abs, tag = 'smem constant byte address 0x4 - core index']
  #allocation1 [shape = 'u32[144,128]{1,0:T(1,128)}', space=vmem, size = 0x12000, scoped, tag = 'internal scratch']
  %s0 = inlined_call_operand.hbm [shape: f32[2,16,128], index: 0, kind: input, shape index: {}]
  %s1 = inlined_call_operand.hbm [shape: f32[16,128], index: 1, kind: input, shape index: {}]
  %s2 = inlined_call_operand.hbm [shape: f32[16,128], index: 2, kind: input, shape index: {}]
  %s3 = inlined_call_operand.vmem [shape: f32[1,128], index: 3, kind: input, shape index: {}]
  %s4 = inlined_call_operand.vmem [shape: f32[1,128], index: 4, kind: input, shape index: {}]
  %s5 = inlined_call_operand.hbm [shape: bf16[128,128], index: 5, kind: input, shape index: {}]
  %s6 = inlined_call_operand.vmem [shape: f32[1,128], index: 6, kind: input, shape index: {}]
  %s7 = inlined_call_operand.hbm [shape: bf16[128,128], index: 7, kind: input, shape index: {}]
  %s8 = inlined_call_operand.vmem [shape: f32[1,128], index: 8, kind: input, shape index: {}]
  %s9 = inlined_call_operand.hbm [shape: bf16[128,128], index: 9, kind: input, shape index: {}]
  %s10 = inlined_call_operand.vmem [shape: f32[1,128], index: 10, kind: input, shape index: {}]
  %s11 = inlined_call_operand.hbm [shape: bf16[2,16,128], index: 11, kind: output, shape index: {0}]
  %s12 = inlined_call_operand.hbm [shape: bf16[2,16,128], index: 12, kind: output, shape index: {1}]
  %s13 = inlined_call_operand.hbm [shape: bf16[2,16,128], index: 13, kind: output, shape index: {2}]
  %14 = xla_tuple %s11, %s12, %s13
  %s15 = sld [smem:[#allocation0]]
  $region117: #{tpu_custom_call.1} parent=0
    _
  %s17 = ssub.s32 1, %s15
  %s18 = scalar_select 0, %s17, %s15
  $region1: #{tpu_custom_call.1} parent=0
    #allocation2 [shape = 'u8[16384]{0}', space=vmem, size = 0x4000, scoped, tag = 'input window, operand 0']
    #allocation3 [shape = 's32[2]{0}', space=sflag, size = 0x8, scoped, tag = 'scoped memory for tpu_custom_call.1']
    #allocation4 [shape = 's32[2]{0}', space=sflag, size = 0x8, scoped, tag = 'scoped memory for tpu_custom_call.1']
    #allocation5 [shape = 'u8[8192]{0}', space=vmem, size = 0x2000, scoped, tag = 'input window, operand 1, single buffered']
    #allocation6 [shape = 's32[1]{0}', space=sflag, size = 0x4, scoped, tag = 'scoped memory for tpu_custom_call.1']
    #allocation7 [shape = 'u8[8192]{0}', space=vmem, size = 0x2000, scoped, tag = 'input window, operand 2, single buffered']
    #allocation8 [shape = 'u8[32768]{0}', space=vmem, size = 0x8000, scoped, tag = 'input window, operand 5, single buffered']
    #allocation9 [shape = 's32[1]{0}', space=sflag, size = 0x4, scoped, tag = 'scoped memory for tpu_custom_call.1']
    #allocation10 [shape = 'u8[32768]{0}', space=vmem, size = 0x8000, scoped, tag = 'input window, operand 7, single buffered']
    #allocation11 [shape = 'u8[32768]{0}', space=vmem, size = 0x8000, scoped, tag = 'input window, operand 9, single buffered']
    #allocation12 [shape = 's32[1]{0}', space=sflag, size = 0x4, scoped, tag = 'scoped memory for tpu_custom_call.1']
    #allocation13 [shape = 'u8[8192]{0}', space=vmem, size = 0x2000, scoped, tag = 'output window, operand 0']
    #allocation14 [shape = 'u8[8192]{0}', space=vmem, size = 0x2000, scoped, tag = 'output window, operand 1']
    #allocation15 [shape = 's32[2]{0}', space=sflag, size = 0x8, scoped, tag = 'scoped memory for tpu_custom_call.1']
    #allocation16 [shape = 'u8[8192]{0}', space=vmem, size = 0x2000, scoped, tag = 'output window, operand 2']
    %19 = vsyncpa [#allocation3], 0
    %s20 = scalar_lea.sflag [#allocation3], 1
    %21 = vsyncpa %s20, 0
    %22 = vsyncpa [#allocation6], 0
    %23 = vsyncpa [#allocation9], 0
    %24 = vsyncpa [#allocation12], 0
    %25 = vsyncpa [#allocation4], 0
    %s26 = scalar_lea.sflag [#allocation4], 1
    %27 = vsyncpa %s26, 0
    %28 = vsyncpa [#allocation15], 0
    %s29 = scalar_lea.sflag [#allocation15], 1
    %30 = vsyncpa %s29, 0
    loop: start=0, step=1, limit=4
    $region2: #{tpu_custom_call.1} parent=1 // loop_pre_header
      _
    $region3: #{tpu_custom_call.1} parent=1 // loop_header
      %s32 = sphi 0, %s36
      %p33 = scmp.ge.s32.totalorder %s32, 4
      %s39 = sphi 0, %s51
      %s40 = sphi 0, %s47
      %s41 = sphi 0, %s39
      %s42 = sphi 0, %s40
      %s43 = sphi 0, %s41
      %s44 = sphi 0, %s42
      %s56 = sphi 0, %s58
      %s59 = sphi 0, %s56
      %s60 = sphi 0, %s59
      %s76 = sphi 0, %s60
      %s82 = sphi 0, %s84
      %s85 = sphi 0, %s82
      %s86 = sphi 0, %s85
      %s102 = sphi 0, %s86
      %s108 = sphi 0, %s110
      %s111 = sphi 0, %s108
      %s112 = sphi 0, %s111
      %s128 = sphi 0, %s112
      %s132 = sphi 0, %s132
      %s134 = sphi 0, %s132
      %s135 = sphi 0, %s134
      %s149 = sphi 0, %s135
      %s153 = sphi 0, %s153
      %s155 = sphi 0, %s153
      %s156 = sphi 0, %s155
      %s170 = sphi 0, %s156
      %s174 = sphi 0, %s174
      %s176 = sphi 0, %s174
      %s177 = sphi 0, %s176
      %s191 = sphi 0, %s177
      %s195 = sphi 0, %s195
      %s197 = sphi 0, %s195
      %s198 = sphi 0, %s197
      %s212 = sphi 0, %s198
      %s216 = sphi 0, %s216
      %s218 = sphi 0, %s216
      %s219 = sphi 0, %s218
      %s233 = sphi 0, %s219
      %s237 = sphi 0, %s237
      %s239 = sphi 0, %s237
      %s240 = sphi 0, %s239
      %s254 = sphi 0, %s240
      %s258 = sphi 0, %s258
      %s260 = sphi 0, %s258
      %s261 = sphi 0, %s260
      %s275 = sphi 0, %s261
      %s279 = sphi 0, %s279
      %s281 = sphi 0, %s279
      %s282 = sphi 0, %s281
      %s296 = sphi 0, %s282
      %s304 = sphi 0, %s306
      %s307 = sphi 0, %s304
      %s308 = sphi 0, %s307
      %s324 = sphi 0, %s308
      %s332 = sphi 0, %s334
      %s335 = sphi 0, %s332
      %s336 = sphi 0, %s335
      %s352 = sphi 0, %s336
      %s360 = sphi 0, %s362
      %s363 = sphi 0, %s360
      %s364 = sphi 0, %s363
      %s380 = sphi 0, %s364
    $region4: #{tpu_custom_call.1} parent=1 // loop_header_branch
      %35 = sbr.rel (%p33) target = $region8
    $region5: #{tpu_custom_call.1} parent=1 // loop_body
      %s37 = ssub.s32 %s32, 1
      %s38 = ssub.s32 %s32, 2
      %s45 = sadd.s32 1, %s40
      %p46 = scmp.ge.s32.totalorder %s45, 1
      %s47 = scalar_select %p46, 0, %s45
      %s48 = sadd.s32 1, %s39
      %s49 = scalar_select %p46, %s48, %s39
      %p50 = scmp.ge.s32.totalorder %s49, 2
      %s51 = scalar_select %p50, 0, %s49
      %s52 = ssub.s32 %s39, %s51
      %s53 = ssub.s32 %s40, %s47
      %s54 = sor.u32 %s52, %s53
      %p55 = scmp.eq.s32.totalorder %s54, 0
      %s57 = sadd.s32 %s56, 1
      %s58 = scalar_select %p55, %s56, %s57
      %p61 = pneg %p55
      %p62 = scmp.eq.s32.totalorder %s32, 1
      %p63 = por %p61, %p62
      %p64 = scmp.ne.s32.totalorder %s56, %s59
      %p65 = scmp.eq.s32.totalorder %s32, 0
      %p66 = por %p64, %p65
      %p67 = scmp.ne.s32.totalorder %s56, %s59
      %p68 = scmp.eq.s32.totalorder %s37, 1
      %p69 = por %p67, %p68
      %p70 = scmp.ne.s32.totalorder %s59, %s60
      %p71 = scmp.eq.s32.totalorder %s37, 0
      %p72 = por %p70, %p71
      %p73 = scmp.ne.s32.totalorder %s59, %s60
      %p74 = scmp.eq.s32.totalorder %s38, 1
      %p75 = por %p73, %p74
      %p77 = scmp.ne.s32.totalorder %s60, %s76
      %p78 = scmp.eq.s32.totalorder %s38, 0
      %p79 = por %p77, %p78
      %s80 = ssub.s32 %s40, %s47
      %p81 = scmp.eq.s32.totalorder %s80, 0
      %s83 = sadd.s32 %s82, 1
      %s84 = scalar_select %p81, %s82, %s83
      %p87 = pneg %p81
      %p88 = scmp.eq.s32.totalorder %s32, 1
      %p89 = por %p87, %p88
      %p90 = scmp.ne.s32.totalorder %s82, %s85
      %p91 = scmp.eq.s32.totalorder %s32, 0
      %p92 = por %p90, %p91
      %p93 = scmp.ne.s32.totalorder %s82, %s85
      %p94 = scmp.eq.s32.totalorder %s37, 1
      %p95 = por %p93, %p94
      %p96 = scmp.ne.s32.totalorder %s85, %s86
      %p97 = scmp.eq.s32.totalorder %s37, 0
      %p98 = por %p96, %p97
      %p99 = scmp.ne.s32.totalorder %s85, %s86
      %p100 = scmp.eq.s32.totalorder %s38, 1
      %p101 = por %p99, %p100
      %p103 = scmp.ne.s32.totalorder %s86, %s102
      %p104 = scmp.eq.s32.totalorder %s38, 0
      %p105 = por %p103, %p104
      %s106 = ssub.s32 %s40, %s47
      %p107 = scmp.eq.s32.totalorder %s106, 0
      %s109 = sadd.s32 %s108, 1
      %s110 = scalar_select %p107, %s108, %s109
      %p113 = pneg %p107
      %p114 = scmp.eq.s32.totalorder %s32, 1
      %p115 = por %p113, %p114
      %p116 = scmp.ne.s32.totalorder %s108, %s111
      %p117 = scmp.eq.s32.totalorder %s32, 0
      %p118 = por %p116, %p117
      %p119 = scmp.ne.s32.totalorder %s108, %s111
      %p120 = scmp.eq.s32.totalorder %s37, 1
      %p121 = por %p119, %p120
      %p122 = scmp.ne.s32.totalorder %s111, %s112
      %p123 = scmp.eq.s32.totalorder %s37, 0
      %p124 = por %p122, %p123
      %p125 = scmp.ne.s32.totalorder %s111, %s112
      %p126 = scmp.eq.s32.totalorder %s38, 1
      %p127 = por %p125, %p126
      %p129 = scmp.ne.s32.totalorder %s112, %s128
      %p130 = scmp.eq.s32.totalorder %s38, 0
      %p131 = por %p129, %p130
      %s133 = sadd.s32 %s132, 1
      %p136 = scmp.eq.s32.totalorder %s32, 1
      %p137 = scmp.ne.s32.totalorder %s132, %s134
      %p138 = scmp.eq.s32.totalorder %s32, 0
      %p139 = por %p137, %p138
      %p140 = scmp.ne.s32.totalorder %s132, %s134
      %p141 = scmp.eq.s32.totalorder %s37, 1
      %p142 = por %p140, %p141
      %p143 = scmp.ne.s32.totalorder %s134, %s135
      %p144 = scmp.eq.s32.totalorder %s37, 0
      %p145 = por %p143, %p144
      %p146 = scmp.ne.s32.totalorder %s134, %s135
      %p147 = scmp.eq.s32.totalorder %s38, 1
      %p148 = por %p146, %p147
      %p150 = scmp.ne.s32.totalorder %s135, %s149
      %p151 = scmp.eq.s32.totalorder %s38, 0
      %p152 = por %p150, %p151
      %s154 = sadd.s32 %s153, 1
      %p157 = scmp.eq.s32.totalorder %s32, 1
      %p158 = scmp.ne.s32.totalorder %s153, %s155
      %p159 = scmp.eq.s32.totalorder %s32, 0
      %p160 = por %p158, %p159
      %p161 = scmp.ne.s32.totalorder %s153, %s155
      %p162 = scmp.eq.s32.totalorder %s37, 1
      %p163 = por %p161, %p162
      %p164 = scmp.ne.s32.totalorder %s155, %s156
      %p165 = scmp.eq.s32.totalorder %s37, 0
      %p166 = por %p164, %p165
      %p167 = scmp.ne.s32.totalorder %s155, %s156
      %p168 = scmp.eq.s32.totalorder %s38, 1
      %p169 = por %p167, %p168
      %p171 = scmp.ne.s32.totalorder %s156, %s170
      %p172 = scmp.eq.s32.totalorder %s38, 0
      %p173 = por %p171, %p172
      %s175 = sadd.s32 %s174, 1
      %p178 = scmp.eq.s32.totalorder %s32, 1
      %p179 = scmp.ne.s32.totalorder %s174, %s176
      %p180 = scmp.eq.s32.totalorder %s32, 0
      %p181 = por %p179, %p180
      %p182 = scmp.ne.s32.totalorder %s174, %s176
      %p183 = scmp.eq.s32.totalorder %s37, 1
      %p184 = por %p182, %p183
      %p185 = scmp.ne.s32.totalorder %s176, %s177
      %p186 = scmp.eq.s32.totalorder %s37, 0
      %p187 = por %p185, %p186
      %p188 = scmp.ne.s32.totalorder %s176, %s177
      %p189 = scmp.eq.s32.totalorder %s38, 1
      %p190 = por %p188, %p189
      %p192 = scmp.ne.s32.totalorder %s177, %s191
      %p193 = scmp.eq.s32.totalorder %s38, 0
      %p194 = por %p192, %p193
      %s196 = sadd.s32 %s195, 1
      %p199 = scmp.eq.s32.totalorder %s32, 1
      %p200 = scmp.ne.s32.totalorder %s195, %s197
      %p201 = scmp.eq.s32.totalorder %s32, 0
      %p202 = por %p200, %p201
      %p203 = scmp.ne.s32.totalorder %s195, %s197
      %p204 = scmp.eq.s32.totalorder %s37, 1
      %p205 = por %p203, %p204
      %p206 = scmp.ne.s32.totalorder %s197, %s198
      %p207 = scmp.eq.s32.totalorder %s37, 0
      %p208 = por %p206, %p207
      %p209 = scmp.ne.s32.totalorder %s197, %s198
      %p210 = scmp.eq.s32.totalorder %s38, 1
      %p211 = por %p209, %p210
      %p213 = scmp.ne.s32.totalorder %s198, %s212
      %p214 = scmp.eq.s32.totalorder %s38, 0
      %p215 = por %p213, %p214
      %s217 = sadd.s32 %s216, 1
      %p220 = scmp.eq.s32.totalorder %s32, 1
      %p221 = scmp.ne.s32.totalorder %s216, %s218
      %p222 = scmp.eq.s32.totalorder %s32, 0
      %p223 = por %p221, %p222
      %p224 = scmp.ne.s32.totalorder %s216, %s218
      %p225 = scmp.eq.s32.totalorder %s37, 1
      %p226 = por %p224, %p225
      %p227 = scmp.ne.s32.totalorder %s218, %s219
      %p228 = scmp.eq.s32.totalorder %s37, 0
      %p229 = por %p227, %p228
      %p230 = scmp.ne.s32.totalorder %s218, %s219
      %p231 = scmp.eq.s32.totalorder %s38, 1
      %p232 = por %p230, %p231
      %p234 = scmp.ne.s32.totalorder %s219, %s233
      %p235 = scmp.eq.s32.totalorder %s38, 0
      %p236 = por %p234, %p235
      %s238 = sadd.s32 %s237, 1
      %p241 = scmp.eq.s32.totalorder %s32, 1
      %p242 = scmp.ne.s32.totalorder %s237, %s239
      %p243 = scmp.eq.s32.totalorder %s32, 0
      %p244 = por %p242, %p243
      %p245 = scmp.ne.s32.totalorder %s237, %s239
      %p246 = scmp.eq.s32.totalorder %s37, 1
      %p247 = por %p245, %p246
      %p248 = scmp.ne.s32.totalorder %s239, %s240
      %p249 = scmp.eq.s32.totalorder %s37, 0
      %p250 = por %p248, %p249
      %p251 = scmp.ne.s32.totalorder %s239, %s240
      %p252 = scmp.eq.s32.totalorder %s38, 1
      %p253 = por %p251, %p252
      %p255 = scmp.ne.s32.totalorder %s240, %s254
      %p256 = scmp.eq.s32.totalorder %s38, 0
      %p257 = por %p255, %p256
      %s259 = sadd.s32 %s258, 1
      %p262 = scmp.eq.s32.totalorder %s32, 1
      %p263 = scmp.ne.s32.totalorder %s258, %s260
      %p264 = scmp.eq.s32.totalorder %s32, 0
      %p265 = por %p263, %p264
      %p266 = scmp.ne.s32.totalorder %s258, %s260
      %p267 = scmp.eq.s32.totalorder %s37, 1
      %p268 = por %p266, %p267
      %p269 = scmp.ne.s32.totalorder %s260, %s261
      %p270 = scmp.eq.s32.totalorder %s37, 0
      %p271 = por %p269, %p270
      %p272 = scmp.ne.s32.totalorder %s260, %s261
      %p273 = scmp.eq.s32.totalorder %s38, 1
      %p274 = por %p272, %p273
      %p276 = scmp.ne.s32.totalorder %s261, %s275
      %p277 = scmp.eq.s32.totalorder %s38, 0
      %p278 = por %p276, %p277
      %s280 = sadd.s32 %s279, 1
      %p283 = scmp.eq.s32.totalorder %s32, 1
      %p284 = scmp.ne.s32.totalorder %s279, %s281
      %p285 = scmp.eq.s32.totalorder %s32, 0
      %p286 = por %p284, %p285
      %p287 = scmp.ne.s32.totalorder %s279, %s281
      %p288 = scmp.eq.s32.totalorder %s37, 1
      %p289 = por %p287, %p288
      %p290 = scmp.ne.s32.totalorder %s281, %s282
      %p291 = scmp.eq.s32.totalorder %s37, 0
      %p292 = por %p290, %p291
      %p293 = scmp.ne.s32.totalorder %s281, %s282
      %p294 = scmp.eq.s32.totalorder %s38, 1
      %p295 = por %p293, %p294
      %p297 = scmp.ne.s32.totalorder %s282, %s296
      %p298 = scmp.eq.s32.totalorder %s38, 0
      %p299 = por %p297, %p298
      %s300 = ssub.s32 %s39, %s51
      %s301 = ssub.s32 %s40, %s47
      %s302 = sor.u32 %s300, %s301
      %p303 = scmp.eq.s32.totalorder %s302, 0
      %s305 = sadd.s32 %s304, 1
      %s306 = scalar_select %p303, %s304, %s305
      %p309 = pneg %p303
      %p310 = scmp.eq.s32.totalorder %s32, 1
      %p311 = por %p309, %p310
      %p312 = scmp.ne.s32.totalorder %s304, %s307
      %p313 = scmp.eq.s32.totalorder %s32, 0
      %p314 = por %p312, %p313
      %p315 = scmp.ne.s32.totalorder %s304, %s307
      %p316 = scmp.eq.s32.totalorder %s37, 1
      %p317 = por %p315, %p316
      %p318 = scmp.ne.s32.totalorder %s307, %s308
      %p319 = scmp.eq.s32.totalorder %s37, 0
      %p320 = por %p318, %p319
      %p321 = scmp.ne.s32.totalorder %s307, %s308
      %p322 = scmp.eq.s32.totalorder %s38, 1
      %p323 = por %p321, %p322
      %p325 = scmp.ne.s32.totalorder %s308, %s324
      %p326 = scmp.eq.s32.totalorder %s38, 0
      %p327 = por %p325, %p326
      %s328 = ssub.s32 %s39, %s51
      %s329 = ssub.s32 %s40, %s47
      %s330 = sor.u32 %s328, %s329
      %p331 = scmp.eq.s32.totalorder %s330, 0
      %s333 = sadd.s32 %s332, 1
      %s334 = scalar_select %p331, %s332, %s333
      %p337 = pneg %p331
      %p338 = scmp.eq.s32.totalorder %s32, 1
      %p339 = por %p337, %p338
      %p340 = scmp.ne.s32.totalorder %s332, %s335
      %p341 = scmp.eq.s32.totalorder %s32, 0
      %p342 = por %p340, %p341
      %p343 = scmp.ne.s32.totalorder %s332, %s335
      %p344 = scmp.eq.s32.totalorder %s37, 1
      %p345 = por %p343, %p344
      %p346 = scmp.ne.s32.totalorder %s335, %s336
      %p347 = scmp.eq.s32.totalorder %s37, 0
      %p348 = por %p346, %p347
      %p349 = scmp.ne.s32.totalorder %s335, %s336
      %p350 = scmp.eq.s32.totalorder %s38, 1
      %p351 = por %p349, %p350
      %p353 = scmp.ne.s32.totalorder %s336, %s352
      %p354 = scmp.eq.s32.totalorder %s38, 0
      %p355 = por %p353, %p354
      %s356 = ssub.s32 %s39, %s51
      %s357 = ssub.s32 %s40, %s47
      %s358 = sor.u32 %s356, %s357
      %p359 = scmp.eq.s32.totalorder %s358, 0
      %s361 = sadd.s32 %s360, 1
      %s362 = scalar_select %p359, %s360, %s361
      %p365 = pneg %p359
      %p366 = scmp.eq.s32.totalorder %s32, 1
      %p367 = por %p365, %p366
      %p368 = scmp.ne.s32.totalorder %s360, %s363
      %p369 = scmp.eq.s32.totalorder %s32, 0
      %p370 = por %p368, %p369
      %p371 = scmp.ne.s32.totalorder %s360, %s363
      %p372 = scmp.eq.s32.totalorder %s37, 1
      %p373 = por %p371, %p372
      %p374 = scmp.ne.s32.totalorder %s363, %s364
      %p375 = scmp.eq.s32.totalorder %s37, 0
      %p376 = por %p374, %p375
      %p377 = scmp.ne.s32.totalorder %s363, %s364
      %p378 = scmp.eq.s32.totalorder %s38, 1
      %p379 = por %p377, %p378
      %p381 = scmp.ne.s32.totalorder %s364, %s380
      %p382 = scmp.eq.s32.totalorder %s38, 0
      %p383 = por %p381, %p382
      %p384 = scmp.le.s32.totalorder 1, %s32
      %p385 = scmp.lt.s32.totalorder %s32, 3
      %p386 = pnand %p384, %p385
      %p387 = pneg %p386
      // Predicated region
      $region9: #{tpu_custom_call.1} parent=5 // pred_check
        _
      $region10: #{tpu_custom_call.1} parent=5 // pred_check_branch
        %389 = sbr.rel (%p386) target = $region12
      $region11: #{tpu_custom_call.1} parent=5 // pred_region
        %s390 = ssub.s32 %s32, 1
        // Predicated region
        $region13: #{tpu_custom_call.1} parent=11 // pred_check
          %p391 = pneg %p98
        $region14: #{tpu_custom_call.1} parent=11 // pred_check_branch
          %393 = sbr.rel (%p391) target = $region16
        $region15: #{tpu_custom_call.1} parent=11 // pred_region
          %s394 = smul.u32 2, %s42
          %s396 = ssub.s32 256, 256
          %397 = vsyncadd [#allocation6], %s396
          %s398 = smul.addr %s394, 128
          %s399 = scalar_lea.hbm %s1, %s398
          %s400 = sshll.u32 [#allocation5], 4
          %s401 = int_to_ptr.vmem [resolvable:$true] %s400
          %406 = dma.hbm_to_vmem [thread:$0]  %s399, 256, %s401, [#allocation6], 128, 128, 8
        $region16: #{tpu_custom_call.1} parent=11 // pred_fallthru
          _
        // Predicated region
        $region17: #{tpu_custom_call.1} parent=11 // pred_check
          %p407 = pneg %p124
        $region18: #{tpu_custom_call.1} parent=11 // pred_check_branch
          %409 = sbr.rel (%p407) target = $region20
        $region19: #{tpu_custom_call.1} parent=11 // pred_region
          %s410 = smul.u32 2, %s42
          %s412 = ssub.s32 256, 256
          %413 = vsyncadd [#allocation6], %s412
          %s414 = smul.addr %s410, 128
          %s415 = scalar_lea.hbm %s2, %s414
          %s416 = sshll.u32 [#allocation7], 4
          %s417 = int_to_ptr.vmem [resolvable:$true] %s416
          %422 = dma.hbm_to_vmem [thread:$0]  %s415, 256, %s417, [#allocation6], 128, 128, 8
        $region20: #{tpu_custom_call.1} parent=11 // pred_fallthru
          _
        // Predicated region
        $region21: #{tpu_custom_call.1} parent=11 // pred_check
          %p423 = pneg %p145
        $region22: #{tpu_custom_call.1} parent=11 // pred_check_branch
          %425 = sbr.rel (%p423) target = $region24
        $region23: #{tpu_custom_call.1} parent=11 // pred_region
          _
        $region24: #{tpu_custom_call.1} parent=11 // pred_fallthru
          _
        // Predicated region
        $region25: #{tpu_custom_call.1} parent=11 // pred_check
          %p426 = pneg %p166
        $region26: #{tpu_custom_call.1} parent=11 // pred_check_branch
          %428 = sbr.rel (%p426) target = $region28
        $region27: #{tpu_custom_call.1} parent=11 // pred_region
          _
        $region28: #{tpu_custom_call.1} parent=11 // pred_fallthru
          _
        // Predicated region
        $region29: #{tpu_custom_call.1} parent=11 // pred_check
          %p429 = pneg %p187
        $region30: #{tpu_custom_call.1} parent=11 // pred_check_branch
          %431 = sbr.rel (%p429) target = $region32
        $region31: #{tpu_custom_call.1} parent=11 // pred_region
          %s433 = ssub.s32 1024, 1024
          %434 = vsyncadd [#allocation9], %s433
          %s435 = sshll.u32 [#allocation8], 4
          %s436 = int_to_ptr.vmem [resolvable:$true] %s435
          %441 = dma.hbm_to_vmem [thread:$0]  %s5, 1024, %s436, [#allocation9], 64, 64, 4
        $region32: #{tpu_custom_call.1} parent=11 // pred_fallthru
          _
        // Predicated region
        $region33: #{tpu_custom_call.1} parent=11 // pred_check
          %p442 = pneg %p208
        $region34: #{tpu_custom_call.1} parent=11 // pred_check_branch
          %444 = sbr.rel (%p442) target = $region36
        $region35: #{tpu_custom_call.1} parent=11 // pred_region
          _
        $region36: #{tpu_custom_call.1} parent=11 // pred_fallthru
          _
        // Predicated region
        $region37: #{tpu_custom_call.1} parent=11 // pred_check
          %p445 = pneg %p229
        $region38: #{tpu_custom_call.1} parent=11 // pred_check_branch
          %447 = sbr.rel (%p445) target = $region40
        $region39: #{tpu_custom_call.1} parent=11 // pred_region
          %s449 = ssub.s32 1024, 1024
          %450 = vsyncadd [#allocation9], %s449
          %s451 = sshll.u32 [#allocation10], 4
          %s452 = int_to_ptr.vmem [resolvable:$true] %s451
          %457 = dma.hbm_to_vmem [thread:$0]  %s7, 1024, %s452, [#allocation9], 64, 64, 4
        $region40: #{tpu_custom_call.1} parent=11 // pred_fallthru
          _
        // Predicated region
        $region41: #{tpu_custom_call.1} parent=11 // pred_check
          %p458 = pneg %p250
        $region42: #{tpu_custom_call.1} parent=11 // pred_check_branch
          %460 = sbr.rel (%p458) target = $region44
        $region43: #{tpu_custom_call.1} parent=11 // pred_region
          _
        $region44: #{tpu_custom_call.1} parent=11 // pred_fallthru
          _
        // Predicated region
        $region45: #{tpu_custom_call.1} parent=11 // pred_check
          %p461 = pneg %p271
        $region46: #{tpu_custom_call.1} parent=11 // pred_check_branch
          %463 = sbr.rel (%p461) target = $region48
        $region47: #{tpu_custom_call.1} parent=11 // pred_region
          %s465 = ssub.s32 1024, 1024
          %466 = vsyncadd [#allocation12], %s465
          %s467 = sshll.u32 [#allocation11], 4
          %s468 = int_to_ptr.vmem [resolvable:$true] %s467
          %473 = dma.hbm_to_vmem [thread:$0]  %s9, 1024, %s468, [#allocation12], 64, 64, 4
        $region48: #{tpu_custom_call.1} parent=11 // pred_fallthru
          _
        // Predicated region
        $region49: #{tpu_custom_call.1} parent=11 // pred_check
          %p474 = pneg %p292
        $region50: #{tpu_custom_call.1} parent=11 // pred_check_branch
          %476 = sbr.rel (%p474) target = $region52
        $region51: #{tpu_custom_call.1} parent=11 // pred_region
          _
        $region52: #{tpu_custom_call.1} parent=11 // pred_fallthru
          _
      $region12: #{tpu_custom_call.1} parent=5 // pred_fallthru
        _
      %p477 = scmp.lt.s32.totalorder %s32, 2
      // Predicated region
      $region53: #{tpu_custom_call.1} parent=5 // pred_check
        %p478 = pneg %p477
      $region54: #{tpu_custom_call.1} parent=5 // pred_check_branch
        %480 = sbr.rel (%p478) target = $region56
      $region55: #{tpu_custom_call.1} parent=5 // pred_region
        // Predicated region
        $region57: #{tpu_custom_call.1} parent=55 // pred_check
          %p481 = pneg %p66
        $region58: #{tpu_custom_call.1} parent=55 // pred_check_branch
          %483 = sbr.rel (%p481) target = $region60
        $region59: #{tpu_custom_call.1} parent=55 // pred_region
          %s484 = sand.u32 %s56, 1
          %s485 = scalar_lea.sflag [#allocation3], %s484
          %s486 = sand.u32 %s56, 1
          %s487 = smul.addr %s486, 16
          %s488 = scalar_lea.vmem [#allocation2], %s487
          %s489 = smul.u32 2, %s40
          %s491 = ssub.s32 256, 256
          %492 = vsyncadd %s485, %s491
          %s493 = smul.addr %s39, 2
          %s494 = sadd.s32 %s489, %s493
          %s495 = smul.addr %s494, 128
          %s496 = scalar_lea.hbm %s0, %s495
          %s497 = sshll.u32 %s488, 4
          %s498 = int_to_ptr.vmem [resolvable:$true] %s497
          %503 = dma.hbm_to_vmem [thread:$0]  %s496, 256, %s498, %s485, 128, 128, 8
        $region60: #{tpu_custom_call.1} parent=55 // pred_fallthru
          _
      $region56: #{tpu_custom_call.1} parent=5 // pred_fallthru
        _
      %p504 = scmp.le.s32.totalorder 1, %s32
      %p505 = scmp.lt.s32.totalorder %s32, 3
      %p506 = pnand %p504, %p505
      %p507 = pneg %p506
      // Predicated region
      $region61: #{tpu_custom_call.1} parent=5 // pred_check
        _
      $region62: #{tpu_custom_call.1} parent=5 // pred_check_branch
        %509 = sbr.rel (%p506) target = $region64
      $region63: #{tpu_custom_call.1} parent=5 // pred_region
        %s510 = ssub.s32 %s32, 1
        %s511 = sand.u32 %s59, 1
        %s512 = scalar_lea.sflag [#allocation3], %s511
        %s513 = sand.u32 %s59, 1
        %s514 = smul.addr %s513, 16
        %s515 = scalar_lea.vmem [#allocation2], %s514
        // Predicated region
        $region65: #{tpu_custom_call.1} parent=63 // pred_check
          %p516 = pneg %p72
        $region66: #{tpu_custom_call.1} parent=63 // pred_check_branch
          %518 = sbr.rel (%p516) target = $region68
        $region67: #{tpu_custom_call.1} parent=63 // pred_region
          %519 = dma.done %s512, 256
        $region68: #{tpu_custom_call.1} parent=63 // pred_fallthru
          _
        // Predicated region
        $region69: #{tpu_custom_call.1} parent=63 // pred_check
          %p520 = pneg %p98
        $region70: #{tpu_custom_call.1} parent=63 // pred_check_branch
          %522 = sbr.rel (%p520) target = $region72
        $region71: #{tpu_custom_call.1} parent=63 // pred_region
          %523 = dma.done [#allocation6], 256
        $region72: #{tpu_custom_call.1} parent=63 // pred_fallthru
          _
        // Predicated region
        $region73: #{tpu_custom_call.1} parent=63 // pred_check
          %p524 = pneg %p124
        $region74: #{tpu_custom_call.1} parent=63 // pred_check_branch
          %526 = sbr.rel (%p524) target = $region76
        $region75: #{tpu_custom_call.1} parent=63 // pred_region
          %527 = dma.done [#allocation6], 256
        $region76: #{tpu_custom_call.1} parent=63 // pred_fallthru
          _
        // Predicated region
        $region77: #{tpu_custom_call.1} parent=63 // pred_check
          %p528 = pneg %p187
        $region78: #{tpu_custom_call.1} parent=63 // pred_check_branch
          %530 = sbr.rel (%p528) target = $region80
        $region79: #{tpu_custom_call.1} parent=63 // pred_region
          %531 = dma.done [#allocation9], 1024
        $region80: #{tpu_custom_call.1} parent=63 // pred_fallthru
          _
        // Predicated region
        $region81: #{tpu_custom_call.1} parent=63 // pred_check
          %p532 = pneg %p229
        $region82: #{tpu_custom_call.1} parent=63 // pred_check_branch
          %534 = sbr.rel (%p532) target = $region84
        $region83: #{tpu_custom_call.1} parent=63 // pred_region
          %535 = dma.done [#allocation9], 1024
        $region84: #{tpu_custom_call.1} parent=63 // pred_fallthru
          _
        // Predicated region
        $region85: #{tpu_custom_call.1} parent=63 // pred_check
          %p536 = pneg %p271
        $region86: #{tpu_custom_call.1} parent=63 // pred_check_branch
          %538 = sbr.rel (%p536) target = $region88
        $region87: #{tpu_custom_call.1} parent=63 // pred_region
          %539 = dma.done [#allocation12], 1024
        $region88: #{tpu_custom_call.1} parent=63 // pred_fallthru
          _
        %s540 = sand.u32 %s59, 1
        %s541 = scalar_lea.sflag [#allocation3], %s540
        %s542 = sand.u32 %s59, 1
        %s543 = smul.addr %s542, 16
        %s544 = scalar_lea.vmem [#allocation2], %s543
        %p545 = pneg %p72
        %p546 = pneg %p69
        %p547 = pneg %p98
        %p548 = pneg %p95
        %p549 = pneg %p124
        %p550 = pneg %p121
        %p551 = pneg %p145
        %p552 = pneg %p142
        %p553 = pneg %p166
        %p554 = pneg %p163
        %p555 = pneg %p187
        %p556 = pneg %p184
        %p557 = pneg %p208
        %p558 = pneg %p205
        %p559 = pneg %p229
        %p560 = pneg %p226
        %p561 = pneg %p250
        %p562 = pneg %p247
        %p563 = pneg %p271
        %p564 = pneg %p268
        %p565 = pneg %p292
        %p566 = pneg %p289
        %p567 = pneg %p320
        %p568 = pneg %p317
        %s569 = sand.u32 %s307, 1
        %s570 = scalar_lea.sflag [#allocation4], %s569
        %s571 = sand.u32 %s307, 1
        %s572 = smul.addr %s571, 8
        %s573 = scalar_lea.vmem [#allocation13], %s572
        %p574 = pneg %p348
        %p575 = pneg %p345
        %s576 = sand.u32 %s37, 1
        %s577 = scalar_lea.sflag [#allocation15], %s576
        %s578 = sand.u32 %s335, 1
        %s579 = smul.addr %s578, 8
        %s580 = scalar_lea.vmem [#allocation14], %s579
        %p581 = pneg %p376
        %p582 = pneg %p373
        %s583 = sand.u32 %s37, 1
        %s584 = scalar_lea.sflag [#allocation15], %s583
        %s585 = sand.u32 %s363, 1
        %s586 = smul.addr %s585, 8
        %s587 = scalar_lea.vmem [#allocation16], %s586
        %s588 = smul.u32 2, %s42
        %s589 = smul.u32 2, %s42
        %s590 = smul.u32 2, %s42
        %s591 = smul.u32 2, %s42
        %s592 = smul.u32 2, %s42
        %s593 = smul.u32 2, %s42
        %v595 = vld [vmem:[%s515] sm:$0xff]
        %v596 = vld [vmem:[%s515 + $0x8] sm:$0xff]
        %597 = vadd.xlane.f32.xlu0 %v595
        %v598 = vpop.xlane.xlu0 %597
        %599 = vadd.xlane.f32.xlu0 %v596
        %v600 = vpop.xlane.xlu0 %599
        %v601 = vrcp.pop 128.0
        %v602 = vmul.f32 %v598, %v601
        %v603 = vmul.f32 %v600, %v601
        %v604 = vsub.f32 %v595, %v602
        %v605 = vsub.f32 %v596, %v603
        %v606 = vmul.f32 %v604, %v604
        %v607 = vmul.f32 %v605, %v605
        %608 = vadd.xlane.f32.xlu0 %v606
        %v609 = vpop.xlane.xlu0 %608
        %610 = vadd.xlane.f32.xlu0 %v607
        %v611 = vpop.xlane.xlu0 %610
        %v612 = vmul.f32 %v609, %v601
        %v613 = vmul.f32 %v611, %v601
        %v614 = vadd.f32 %v612, 1e-05
        %v615 = vadd.f32 %v613, 1e-05
        %v616 = vrsqrt.pop %v614
        %v617 = vrsqrt.pop %v615
        %v618 = vmul.f32 %v604, %v616
        %v619 = vmul.f32 %v605, %v617
        %v620 = vld [vmem:[%s3] sm:$0x1]
        %v622 = vlaneseq
        %v623 = vshrl.u32 %v622, 7
        %v624 = vsub.s32 0, %v623
        %v625 = vrot.slane %v620, %v624
        %v627 = vmul.f32 %v618, %v625
        %v628 = vmul.f32 %v619, %v625
        %v629 = vld [vmem:[%s4] sm:$0x1]
        %v631 = vlaneseq
        %v632 = vshrl.u32 %v631, 7
        %v633 = vsub.s32 0, %v632
        %v634 = vrot.slane %v629, %v633
        %v636 = vadd.f32 %v627, %v634
        %v637 = vadd.f32 %v628, %v634
        %v638 = vpack.c.bf16 %v637, %v636
        %v639 = vld [vmem:[#allocation8] sm:$0xf]
        %v640 = vld [vmem:[#allocation8 + $0x4] sm:$0xf]
        %v641 = vld [vmem:[#allocation8 + $0x8] sm:$0xf]
        %v642 = vld [vmem:[#allocation8 + $0xc] sm:$0xf]
        %v643 = vld [vmem:[#allocation8 + $0x10] sm:$0xf]
        %v644 = vld [vmem:[#allocation8 + $0x14] sm:$0xf]
        %v645 = vld [vmem:[#allocation8 + $0x18] sm:$0xf]
        %v646 = vld [vmem:[#allocation8 + $0x1c] sm:$0xf]
        %v647 = vld [vmem:[#allocation8 + $0x20] sm:$0xf]
        %v648 = vld [vmem:[#allocation8 + $0x24] sm:$0xf]
        %v649 = vld [vmem:[#allocation8 + $0x28] sm:$0xf]
        %v650 = vld [vmem:[#allocation8 + $0x2c] sm:$0xf]
        %v651 = vld [vmem:[#allocation8 + $0x30] sm:$0xf]
        %v652 = vld [vmem:[#allocation8 + $0x34] sm:$0xf]
        %v653 = vld [vmem:[#allocation8 + $0x38] sm:$0xf]
        %v654 = vld [vmem:[#allocation8 + $0x3c] sm:$0xf]
        %v655 = vld [vmem:[%s6] sm:$0x1]
        %v657 = vlaneseq
        %v658 = vshrl.u32 %v657, 7
        %v659 = vsub.s32 0, %v658
        %v660 = vrot.slane %v655, %v659
        %v678 = vunpack.c.l.b16 %v639
        %v679 = vunpack.c.l.b16 %v640
        %v680 = vunpack.c.l.b16 %v641
        %v681 = vunpack.c.l.b16 %v642
        %v682 = vunpack.c.l.b16 %v643
        %v683 = vunpack.c.l.b16 %v644
        %v684 = vunpack.c.l.b16 %v645
        %v685 = vunpack.c.l.b16 %v646
        %v686 = vunpack.c.l.b16 %v647
        %v687 = vunpack.c.l.b16 %v648
        %v688 = vunpack.c.l.b16 %v649
        %v689 = vunpack.c.l.b16 %v650
        %v690 = vunpack.c.l.b16 %v651
        %v691 = vunpack.c.l.b16 %v652
        %v692 = vunpack.c.l.b16 %v653
        %v693 = vunpack.c.l.b16 %v654
        %v694 = vpack.c.b16 %v679, %v678
        %v695 = vpack.c.b16 %v681, %v680
        %v696 = vpack.c.b16 %v683, %v682
        %v697 = vpack.c.b16 %v685, %v684
        %v698 = vpack.c.b16 %v687, %v686
        %v699 = vpack.c.b16 %v689, %v688
        %v700 = vpack.c.b16 %v691, %v690
        %v701 = vpack.c.b16 %v693, %v692
        %710 = vmatprep.subr.bf16.mxu0 0
        %711 = vmatpush1.bf16.msra.mxu0 %v694
        %712 = vmatprep.subr.bf16.mxu0 0
        %713 = vmatpush1.bf16.msra.mxu0 %v695
        %714 = vmatprep.subr.bf16.mxu0 0
        %715 = vmatpush1.bf16.msra.mxu0 %v696
        %716 = vmatprep.subr.bf16.mxu0 0
        %717 = vmatpush1.bf16.msra.mxu0 %v697
        %718 = vmatprep.subr.bf16.mxu0 0
        %719 = vmatpush1.bf16.msra.mxu0 %v698
        %720 = vmatprep.subr.bf16.mxu0 0
        %721 = vmatpush1.bf16.msra.mxu0 %v699
        %722 = vmatprep.subr.bf16.mxu0 0
        %723 = vmatpush1.bf16.msra.mxu0 %v700
        %724 = vmatprep.subr.bf16.mxu0 0
        %725 = vmatpush1.bf16.msra.mxu0 %v701
        %726 = vmatprep.subr.bf16.mxu0 0
        %727 = vmatpush1.bf16.msra.mxu0 0
        %728 = vmatprep.subr.bf16.mxu0 0
        %729 = vmatpush1.bf16.msra.mxu0 0
        %730 = vmatprep.subr.bf16.mxu0 0
        %731 = vmatpush1.bf16.msra.mxu0 0
        %732 = vmatprep.subr.bf16.mxu0 0
        %733 = vmatpush1.bf16.msra.mxu0 0
        %734 = vmatprep.subr.bf16.mxu0 0
        %735 = vmatpush1.bf16.msra.mxu0 0
        %736 = vmatprep.subr.bf16.mxu0 0
        %737 = vmatpush1.bf16.msra.mxu0 0
        %738 = vmatprep.subr.bf16.mxu0 0
        %739 = vmatpush1.bf16.msra.mxu0 0
        %740 = vmatprep.subr.bf16.mxu0 0
        %741 = vmatpush1.bf16.msra.mxu0 0
        %742 = vmatprep.mubr.bf16.mxu0 0
        %743 = vmatmul.mubr.bf16.gmra.mrb[0].mxu0 %v638
        %v744 = vpop.f32.mrb[0].mxu0
        %v745 = vadd.f32 %v660, %v744
        %v746 = vpop.f32.mrb[0].mxu0
        %v747 = vpop.f32.mrb[0].mxu0
        %v748 = vadd.f32 %v660, %v747
        %v749 = vpop.f32.mrb[0].mxu0
        %750 = vdwg.mxu0
        %v751 = vld [vmem:[#allocation10] sm:$0xf]
        %v752 = vld [vmem:[#allocation10 + $0x4] sm:$0xf]
        %v753 = vld [vmem:[#allocation10 + $0x8] sm:$0xf]
        %v754 = vld [vmem:[#allocation10 + $0xc] sm:$0xf]
        %v755 = vld [vmem:[#allocation10 + $0x10] sm:$0xf]
        %v756 = vld [vmem:[#allocation10 + $0x14] sm:$0xf]
        %v757 = vld [vmem:[#allocation10 + $0x18] sm:$0xf]
        %v758 = vld [vmem:[#allocation10 + $0x1c] sm:$0xf]
        %v759 = vld [vmem:[#allocation10 + $0x20] sm:$0xf]
        %v760 = vld [vmem:[#allocation10 + $0x24] sm:$0xf]
        %v761 = vld [vmem:[#allocation10 + $0x28] sm:$0xf]
        %v762 = vld [vmem:[#allocation10 + $0x2c] sm:$0xf]
        %v763 = vld [vmem:[#allocation10 + $0x30] sm:$0xf]
        %v764 = vld [vmem:[#allocation10 + $0x34] sm:$0xf]
        %v765 = vld [vmem:[#allocation10 + $0x38] sm:$0xf]
        %v766 = vld [vmem:[#allocation10 + $0x3c] sm:$0xf]
        %v767 = vld [vmem:[%s8] sm:$0x1]
        %v769 = vlaneseq
        %v770 = vshrl.u32 %v769, 7
        %v771 = vsub.s32 0, %v770
        %v772 = vrot.slane %v767, %v771
        %v790 = vunpack.c.l.b16 %v751
        %v791 = vunpack.c.l.b16 %v752
        %v792 = vunpack.c.l.b16 %v753
        %v793 = vunpack.c.l.b16 %v754
        %v794 = vunpack.c.l.b16 %v755
        %v795 = vunpack.c.l.b16 %v756
        %v796 = vunpack.c.l.b16 %v757
        %v797 = vunpack.c.l.b16 %v758
        %v798 = vunpack.c.l.b16 %v759
        %v799 = vunpack.c.l.b16 %v760
        %v800 = vunpack.c.l.b16 %v761
        %v801 = vunpack.c.l.b16 %v762
        %v802 = vunpack.c.l.b16 %v763
        %v803 = vunpack.c.l.b16 %v764
        %v804 = vunpack.c.l.b16 %v765
        %v805 = vunpack.c.l.b16 %v766
        %v806 = vpack.c.b16 %v791, %v790
        %v807 = vpack.c.b16 %v793, %v792
        %v808 = vpack.c.b16 %v795, %v794
        %v809 = vpack.c.b16 %v797, %v796
        %v810 = vpack.c.b16 %v799, %v798
        %v811 = vpack.c.b16 %v801, %v800
        %v812 = vpack.c.b16 %v803, %v802
        %v813 = vpack.c.b16 %v805, %v804
        %822 = vmatprep.subr.bf16.mxu0 0
        %823 = vmatpush1.bf16.msra.mxu0 %v806
        %824 = vmatprep.subr.bf16.mxu0 0
        %825 = vmatpush1.bf16.msra.mxu0 %v807
        %826 = vmatprep.subr.bf16.mxu0 0
        %827 = vmatpush1.bf16.msra.mxu0 %v808
        %828 = vmatprep.subr.bf16.mxu0 0
        %829 = vmatpush1.bf16.msra.mxu0 %v809
        %830 = vmatprep.subr.bf16.mxu0 0
        %831 = vmatpush1.bf16.msra.mxu0 %v810
        %832 = vmatprep.subr.bf16.mxu0 0
        %833 = vmatpush1.bf16.msra.mxu0 %v811
        %834 = vmatprep.subr.bf16.mxu0 0
        %835 = vmatpush1.bf16.msra.mxu0 %v812
        %836 = vmatprep.subr.bf16.mxu0 0
        %837 = vmatpush1.bf16.msra.mxu0 %v813
        %838 = vmatprep.subr.bf16.mxu0 0
        %839 = vmatpush1.bf16.msra.mxu0 0
        %840 = vmatprep.subr.bf16.mxu0 0
        %841 = vmatpush1.bf16.msra.mxu0 0
        %842 = vmatprep.subr.bf16.mxu0 0
        %843 = vmatpush1.bf16.msra.mxu0 0
        %844 = vmatprep.subr.bf16.mxu0 0
        %845 = vmatpush1.bf16.msra.mxu0 0
        %846 = vmatprep.subr.bf16.mxu0 0
        %847 = vmatpush1.bf16.msra.mxu0 0
        %848 = vmatprep.subr.bf16.mxu0 0
        %849 = vmatpush1.bf16.msra.mxu0 0
        %850 = vmatprep.subr.bf16.mxu0 0
        %851 = vmatpush1.bf16.msra.mxu0 0
        %852 = vmatprep.subr.bf16.mxu0 0
        %853 = vmatpush1.bf16.msra.mxu0 0
        %854 = vmatprep.mubr.bf16.mxu0 0
        %855 = vmatmul.mubr.bf16.gmra.mrb[0].mxu0 %v638
        %v856 = vpop.f32.mrb[0].mxu0
        %v857 = vadd.f32 %v772, %v856
        %v858 = vpop.f32.mrb[0].mxu0
        %v859 = vpop.f32.mrb[0].mxu0
        %v860 = vadd.f32 %v772, %v859
        %v861 = vpop.f32.mrb[0].mxu0
        %862 = vdwg.mxu0
        %v863 = vld [vmem:[#allocation11] sm:$0xf]
        %v864 = vld [vmem:[#allocation11 + $0x4] sm:$0xf]
        %v865 = vld [vmem:[#allocation11 + $0x8] sm:$0xf]
        %v866 = vld [vmem:[#allocation11 + $0xc] sm:$0xf]
        %v867 = vld [vmem:[#allocation11 + $0x10] sm:$0xf]
        %v868 = vld [vmem:[#allocation11 + $0x14] sm:$0xf]
        %v869 = vld [vmem:[#allocation11 + $0x18] sm:$0xf]
        %v870 = vld [vmem:[#allocation11 + $0x1c] sm:$0xf]
        %v871 = vld [vmem:[#allocation11 + $0x20] sm:$0xf]
        %v872 = vld [vmem:[#allocation11 + $0x24] sm:$0xf]
        %v873 = vld [vmem:[#allocation11 + $0x28] sm:$0xf]
        %v874 = vld [vmem:[#allocation11 + $0x2c] sm:$0xf]
        %v875 = vld [vmem:[#allocation11 + $0x30] sm:$0xf]
        %v876 = vld [vmem:[#allocation11 + $0x34] sm:$0xf]
        %v877 = vld [vmem:[#allocation11 + $0x38] sm:$0xf]
        %v878 = vld [vmem:[#allocation11 + $0x3c] sm:$0xf]
        %v879 = vld [vmem:[%s10] sm:$0x1]
        %v881 = vlaneseq
        %v882 = vshrl.u32 %v881, 7
        %v883 = vsub.s32 0, %v882
        %v884 = vrot.slane %v879, %v883
        %v902 = vunpack.c.l.b16 %v863
        %v903 = vunpack.c.l.b16 %v864
        %v904 = vunpack.c.l.b16 %v865
        %v905 = vunpack.c.l.b16 %v866
        %v906 = vunpack.c.l.b16 %v867
        %v907 = vunpack.c.l.b16 %v868
        %v908 = vunpack.c.l.b16 %v869
        %v909 = vunpack.c.l.b16 %v870
        %v910 = vunpack.c.l.b16 %v871
        %v911 = vunpack.c.l.b16 %v872
        %v912 = vunpack.c.l.b16 %v873
        %v913 = vunpack.c.l.b16 %v874
        %v914 = vunpack.c.l.b16 %v875
        %v915 = vunpack.c.l.b16 %v876
        %v916 = vunpack.c.l.b16 %v877
        %v917 = vunpack.c.l.b16 %v878
        %v918 = vpack.c.b16 %v903, %v902
        %v919 = vpack.c.b16 %v905, %v904
        %v920 = vpack.c.b16 %v907, %v906
        %v921 = vpack.c.b16 %v909, %v908
        %v922 = vpack.c.b16 %v911, %v910
        %v923 = vpack.c.b16 %v913, %v912
        %v924 = vpack.c.b16 %v915, %v914
        %v925 = vpack.c.b16 %v917, %v916
        %934 = vmatprep.subr.bf16.mxu0 0
        %935 = vmatpush1.bf16.msra.mxu0 %v918
        %936 = vmatprep.subr.bf16.mxu0 0
        %937 = vmatpush1.bf16.msra.mxu0 %v919
        %938 = vmatprep.subr.bf16.mxu0 0
        %939 = vmatpush1.bf16.msra.mxu0 %v920
        %940 = vmatprep.subr.bf16.mxu0 0
        %941 = vmatpush1.bf16.msra.mxu0 %v921
        %942 = vmatprep.subr.bf16.mxu0 0
        %943 = vmatpush1.bf16.msra.mxu0 %v922
        %944 = vmatprep.subr.bf16.mxu0 0
        %945 = vmatpush1.bf16.msra.mxu0 %v923
        %946 = vmatprep.subr.bf16.mxu0 0
        %947 = vmatpush1.bf16.msra.mxu0 %v924
        %948 = vmatprep.subr.bf16.mxu0 0
        %949 = vmatpush1.bf16.msra.mxu0 %v925
        %950 = vmatprep.subr.bf16.mxu0 0
        %951 = vmatpush1.bf16.msra.mxu0 0
        %952 = vmatprep.subr.bf16.mxu0 0
        %953 = vmatpush1.bf16.msra.mxu0 0
        %954 = vmatprep.subr.bf16.mxu0 0
        %955 = vmatpush1.bf16.msra.mxu0 0
        %956 = vmatprep.subr.bf16.mxu0 0
        %957 = vmatpush1.bf16.msra.mxu0 0
        %958 = vmatprep.subr.bf16.mxu0 0
        %959 = vmatpush1.bf16.msra.mxu0 0
        %960 = vmatprep.subr.bf16.mxu0 0
        %961 = vmatpush1.bf16.msra.mxu0 0
        %962 = vmatprep.subr.bf16.mxu0 0
        %963 = vmatpush1.bf16.msra.mxu0 0
        %964 = vmatprep.subr.bf16.mxu0 0
        %965 = vmatpush1.bf16.msra.mxu0 0
        %966 = vmatprep.mubr.bf16.mxu0 0
        %967 = vmatmul.mubr.bf16.gmra.mrb[0].mxu0 %v638
        %v968 = vpop.f32.mrb[0].mxu0
        %v969 = vadd.f32 %v884, %v968
        %v970 = vpop.f32.mrb[0].mxu0
        %v971 = vpop.f32.mrb[0].mxu0
        %v972 = vadd.f32 %v884, %v971
        %v973 = vpop.f32.mrb[0].mxu0
        %974 = vdwg.mxu0
        %v975 = vld [vmem:[#allocation5] sm:$0xff]
        %v976 = vld [vmem:[#allocation5 + $0x8] sm:$0xff]
        %v977 = vld [vmem:[#allocation7] sm:$0xff]
        %v978 = vld [vmem:[#allocation7 + $0x8] sm:$0xff]
        %v979 = vsub.f32 0.0, %v745
        %v980 = vsub.f32 0.0, %v748
        %983 = vrot.lane.b32.xlu0 %v979, 112
        %v984 = vpop.permute.xlu0 %983
        %985 = vrot.lane.b32.xlu0 %v980, 112
        %v986 = vpop.permute.xlu0 %985
        %991 = vrot.lane.b32.xlu0 %v745, 16
        %v992 = vpop.permute.xlu0 %991
        %993 = vrot.lane.b32.xlu0 %v748, 16
        %v994 = vpop.permute.xlu0 %993
        %vm997 = vcmask 130048
        %v998 = vsel %vm997, %v984, %v992
        %v999 = vsel %vm997, %v986, %v994
        %vm1000 = vcmask 261120
        %v1001 = vsel %vm1000, %v998, %v984
        %v1002 = vsel %vm1000, %v999, %v986
        %vm1003 = vcmask 392192
        %v1004 = vsel %vm1003, %v1001, %v992
        %v1005 = vsel %vm1003, %v1002, %v994
        %vm1006 = vcmask 523264
        %v1007 = vsel %vm1006, %v1004, %v984
        %v1008 = vsel %vm1006, %v1005, %v986
        %vm1009 = vcmask 654336
        %v1010 = vsel %vm1009, %v1007, %v992
        %v1011 = vsel %vm1009, %v1008, %v994
        %vm1012 = vcmask 785408
        %v1013 = vsel %vm1012, %v1010, %v984
        %v1014 = vsel %vm1012, %v1011, %v986
        %vm1015 = vcmask 916480
        %v1016 = vsel %vm1015, %v1013, %v992
        %v1017 = vsel %vm1015, %v1014, %v994
        %v1018 = vmul.f32 %v745, %v975
        %v1019 = vmul.f32 %v748, %v976
        %v1020 = vmul.f32 %v1016, %v977
        %v1021 = vmul.f32 %v1017, %v978
        %v1022 = vadd.f32 %v1018, %v1020
        %v1023 = vadd.f32 %v1019, %v1021
        %v1024 = vpack.c.bf16 %v1023, %v1022
        %v1026 = vunpack.c.l.b16 %v1024
        %v1027 = vunpack.c.h.b16 %v1024
        %v1028 = vpack.c.b16 %v1026, %v1026
        %v1029 = vpack.c.b16 %v1027, %v1027
        %1032 = vst [vmem:[%s573] sm:$0xf] %v1028
        %1033 = vst [vmem:[%s573 + $0x4] sm:$0xf] %v1029
        %v1034 = vsub.f32 0.0, %v857
        %v1035 = vsub.f32 0.0, %v860
        %1038 = vrot.lane.b32.xlu0 %v1034, 112
        %v1039 = vpop.permute.xlu0 %1038
        %1040 = vrot.lane.b32.xlu0 %v1035, 112
        %v1041 = vpop.permute.xlu0 %1040
        %1046 = vrot.lane.b32.xlu0 %v857, 16
        %v1047 = vpop.permute.xlu0 %1046
        %1048 = vrot.lane.b32.xlu0 %v860, 16
        %v1049 = vpop.permute.xlu0 %1048
        %v1052 = vsel %vm997, %v1039, %v1047
        %v1053 = vsel %vm997, %v1041, %v1049
        %v1054 = vsel %vm1000, %v1052, %v1039
        %v1055 = vsel %vm1000, %v1053, %v1041
        %v1056 = vsel %vm1003, %v1054, %v1047
        %v1057 = vsel %vm1003, %v1055, %v1049
        %v1058 = vsel %vm1006, %v1056, %v1039
        %v1059 = vsel %vm1006, %v1057, %v1041
        %v1060 = vsel %vm1009, %v1058, %v1047
        %v1061 = vsel %vm1009, %v1059, %v1049
        %v1062 = vsel %vm1012, %v1060, %v1039
        %v1063 = vsel %vm1012, %v1061, %v1041
        %v1064 = vsel %vm1015, %v1062, %v1047
        %v1065 = vsel %vm1015, %v1063, %v1049
        %v1066 = vmul.f32 %v857, %v975
        %v1067 = vmul.f32 %v860, %v976
        %v1068 = vmul.f32 %v1064, %v977
        %v1069 = vmul.f32 %v1065, %v978
        %v1070 = vadd.f32 %v1066, %v1068
        %v1071 = vadd.f32 %v1067, %v1069
        %v1072 = vpack.c.bf16 %v1071, %v1070
        %v1074 = vunpack.c.l.b16 %v1072
        %v1075 = vunpack.c.h.b16 %v1072
        %v1076 = vpack.c.b16 %v1074, %v1074
        %v1077 = vpack.c.b16 %v1075, %v1075
        %1080 = vst [vmem:[%s580] sm:$0xf] %v1076
        %1081 = vst [vmem:[%s580 + $0x4] sm:$0xf] %v1077
        %v1082 = vpack.c.bf16 %v972, %v969
        %v1084 = vunpack.c.l.b16 %v1082
        %v1085 = vunpack.c.h.b16 %v1082
        %v1086 = vpack.c.b16 %v1084, %v1084
        %v1087 = vpack.c.b16 %v1085, %v1085
        %1090 = vst [vmem:[%s587] sm:$0xf] %v1086
        %1091 = vst [vmem:[%s587 + $0x4] sm:$0xf] %v1087
        %s1092 = sand.u32 %s307, 1
        %s1093 = scalar_lea.sflag [#allocation4], %s1092
        %s1094 = sand.u32 %s307, 1
        %s1095 = smul.addr %s1094, 8
        %s1096 = scalar_lea.vmem [#allocation13], %s1095
        %s1097 = sand.u32 %s37, 1
        %s1098 = scalar_lea.sflag [#allocation15], %s1097
        %s1099 = sand.u32 %s335, 1
        %s1100 = smul.addr %s1099, 8
        %s1101 = scalar_lea.vmem [#allocation14], %s1100
        %s1102 = sand.u32 %s37, 1
        %s1103 = scalar_lea.sflag [#allocation15], %s1102
        %s1104 = sand.u32 %s363, 1
        %s1105 = smul.addr %s1104, 8
        %s1106 = scalar_lea.vmem [#allocation16], %s1105
        // Predicated region
        $region89: #{tpu_custom_call.1} parent=63 // pred_check
          %p1107 = pneg %p317
        $region90: #{tpu_custom_call.1} parent=63 // pred_check_branch
          %1109 = sbr.rel (%p1107) target = $region92
        $region91: #{tpu_custom_call.1} parent=63 // pred_region
          %s1110 = smul.u32 2, %s42
          %s1112 = ssub.s32 128, 128
          %1113 = vsyncadd %s1093, %s1112
          %s1114 = smul.addr %s41, 2
          %s1115 = sadd.s32 %s1110, %s1114
          %s1116 = smul.addr %s1115, 64
          %s1117 = scalar_lea.hbm %s11, %s1116
          %s1118 = sshll.u32 %s1096, 4
          %s1119 = int_to_ptr.vmem [resolvable:$true] %s1118
          %1124 = dma.vmem_to_hbm [thread:$0]  %s1119, 128, %s1117, %s1093, 64, 64, 4
        $region92: #{tpu_custom_call.1} parent=63 // pred_fallthru
          _
        // Predicated region
        $region93: #{tpu_custom_call.1} parent=63 // pred_check
          %p1125 = pneg %p345
        $region94: #{tpu_custom_call.1} parent=63 // pred_check_branch
          %1127 = sbr.rel (%p1125) target = $region96
        $region95: #{tpu_custom_call.1} parent=63 // pred_region
          %s1128 = smul.u32 2, %s42
          %s1130 = ssub.s32 128, 128
          %1131 = vsyncadd %s1098, %s1130
          %s1132 = smul.addr %s41, 2
          %s1133 = sadd.s32 %s1128, %s1132
          %s1134 = smul.addr %s1133, 64
          %s1135 = scalar_lea.hbm %s12, %s1134
          %s1136 = sshll.u32 %s1101, 4
          %s1137 = int_to_ptr.vmem [resolvable:$true] %s1136
          %1142 = dma.vmem_to_hbm [thread:$0]  %s1137, 128, %s1135, %s1098, 64, 64, 4
        $region96: #{tpu_custom_call.1} parent=63 // pred_fallthru
          _
        // Predicated region
        $region97: #{tpu_custom_call.1} parent=63 // pred_check
          %p1143 = pneg %p373
        $region98: #{tpu_custom_call.1} parent=63 // pred_check_branch
          %1145 = sbr.rel (%p1143) target = $region100
        $region99: #{tpu_custom_call.1} parent=63 // pred_region
          %s1146 = smul.u32 2, %s42
          %s1148 = ssub.s32 128, 128
          %1149 = vsyncadd %s1103, %s1148
          %s1150 = smul.addr %s41, 2
          %s1151 = sadd.s32 %s1146, %s1150
          %s1152 = smul.addr %s1151, 64
          %s1153 = scalar_lea.hbm %s13, %s1152
          %s1154 = sshll.u32 %s1106, 4
          %s1155 = int_to_ptr.vmem [resolvable:$true] %s1154
          %1160 = dma.vmem_to_hbm [thread:$0]  %s1155, 128, %s1153, %s1103, 64, 64, 4
        $region100: #{tpu_custom_call.1} parent=63 // pred_fallthru
          _
      $region64: #{tpu_custom_call.1} parent=5 // pred_fallthru
        _
      %p1161 = scmp.le.s32.totalorder 2, %s32
      // Predicated region
      $region101: #{tpu_custom_call.1} parent=5 // pred_check
        %p1162 = pneg %p1161
      $region102: #{tpu_custom_call.1} parent=5 // pred_check_branch
        %1164 = sbr.rel (%p1162) target = $region104
      $region103: #{tpu_custom_call.1} parent=5 // pred_region
        %s1165 = ssub.s32 %s32, 2
        // Predicated region
        $region105: #{tpu_custom_call.1} parent=103 // pred_check
          %p1166 = pneg %p323
        $region106: #{tpu_custom_call.1} parent=103 // pred_check_branch
          %1168 = sbr.rel (%p1166) target = $region108
        $region107: #{tpu_custom_call.1} parent=103 // pred_region
          %s1169 = sand.u32 %s308, 1
          %s1170 = scalar_lea.sflag [#allocation4], %s1169
          %s1171 = sand.u32 %s308, 1
          %s1172 = smul.addr %s1171, 8
          %s1173 = scalar_lea.vmem [#allocation13], %s1172
          %1174 = dma.done %s1170, 128
        $region108: #{tpu_custom_call.1} parent=103 // pred_fallthru
          _
        // Predicated region
        $region109: #{tpu_custom_call.1} parent=103 // pred_check
          %p1175 = pneg %p351
        $region110: #{tpu_custom_call.1} parent=103 // pred_check_branch
          %1177 = sbr.rel (%p1175) target = $region112
        $region111: #{tpu_custom_call.1} parent=103 // pred_region
          %s1178 = sand.u32 %s38, 1
          %s1179 = scalar_lea.sflag [#allocation15], %s1178
          %s1180 = sand.u32 %s336, 1
          %s1181 = smul.addr %s1180, 8
          %s1182 = scalar_lea.vmem [#allocation14], %s1181
          %1183 = dma.done %s1179, 128
        $region112: #{tpu_custom_call.1} parent=103 // pred_fallthru
          _
        // Predicated region
        $region113: #{tpu_custom_call.1} parent=103 // pred_check
          %p1184 = pneg %p379
        $region114: #{tpu_custom_call.1} parent=103 // pred_check_branch
          %1186 = sbr.rel (%p1184) target = $region116
        $region115: #{tpu_custom_call.1} parent=103 // pred_region
          %s1187 = sand.u32 %s38, 1
          %s1188 = scalar_lea.sflag [#allocation15], %s1187
          %s1189 = sand.u32 %s364, 1
          %s1190 = smul.addr %s1189, 8
          %s1191 = scalar_lea.vmem [#allocation16], %s1190
          %1192 = dma.done %s1188, 128
        $region116: #{tpu_custom_call.1} parent=103 // pred_fallthru
          _
      $region104: #{tpu_custom_call.1} parent=5 // pred_fallthru
        _
    $region6: #{tpu_custom_call.1} parent=1 // loop_footer
      %s36 = sadd.s32 1, %s32
    $region7: #{tpu_custom_call.1} parent=1 // loop_footer_branch
      %31 = sbr.rel target = $region3
    $region8: #{tpu_custom_call.1} parent=1 // loop_exit
      _
    %1193 = vsyncpa [#allocation3], 1
    %s1194 = scalar_lea.sflag [#allocation3], 1
    %1195 = vsyncpa %s1194, 1
    %1196 = vsyncpa [#allocation6], 1
    %1197 = vsyncpa [#allocation9], 1
    %1198 = vsyncpa [#allocation12], 1
    %1199 = vsyncpa [#allocation4], 1
    %s1200 = scalar_lea.sflag [#allocation4], 1
    %1201 = vsyncpa %s1200, 1
    %1202 = vsyncpa [#allocation15], 1
    %s1203 = scalar_lea.sflag [#allocation15], 1
    %1204 = vsyncpa %s1203, 1

</llo_original>
